<compile_context>
chip_gen: v6e
topology: v6e:2x2x1
jax: 0.10.0
libtpu: 0.0.40
codegen_flags: <defaults>
</compile_context>

<pallas_src>
import math
import functools

import jax
import jax.numpy as jnp
from jax.experimental import pallas as pl
from jax.experimental.pallas import tpu as pltpu


# ---------------------------------------------------------------------------
# helpers
# ---------------------------------------------------------------------------
def _layernorm(x, gamma, beta, eps=1e-5):
    # torch.nn.LayerNorm over the last dim (biased variance), f32 math.
    mean = jnp.mean(x, axis=-1, keepdims=True)
    var = jnp.mean((x - mean) ** 2, axis=-1, keepdims=True)
    return (x - mean) * jax.lax.rsqrt(var + eps) * gamma + beta


_VMEM_LIMIT = 48 * 1024 * 1024  # generous scoped-VMEM limit, still < v7x 64 MiB physical


# ---------------------------------------------------------------------------
# fused kernel: x + MultiHeadAttention(norm(x), kv, kv, mask)   (pre-norm residual)
#   grid = (B, h); the head axis is a reduction into an f32 accumulator.
#   self-attn: k/v source is norm(x) (cached); cross-attn: k/v source is the encoder memory m.
# ---------------------------------------------------------------------------
def _mha_res_kernel(h, d_k, is_self, *refs):
    if is_self:
        (x_ref, mask_ref, g_ref, b_ref,
         wq_ref, bq_ref, wkv_ref, bkv_ref, wo_ref, bo_ref,
         o_ref, acc_ref, xn_ref, bias_ref) = refs
    else:
        (x_ref, m_ref, mask_ref, g_ref, b_ref,
         wq_ref, bq_ref, wkv_ref, bkv_ref, wo_ref, bo_ref,
         o_ref, acc_ref, xn_ref, kvn_ref, bias_ref) = refs

    hi = pl.program_id(1)

    @pl.when(hi == 0)
    def _init():
        x = x_ref[0].astype(jnp.float32)                          # (Sq, D)
        xn_ref[...] = _layernorm(x, g_ref[...], b_ref[...]).astype(jnp.bfloat16)
        if not is_self:
            kvn_ref[...] = m_ref[0].astype(jnp.bfloat16)          # encoder memory (un-normed)
        # additive mask bias, computed once (hoisted out of the per-head loop)
        bias_ref[...] = jnp.where(mask_ref[0] == 0.0, -1e9, 0.0).astype(jnp.float32)
        # residual + output-projection bias, added once
        acc_ref[...] = x + bo_ref[...]

    xn = xn_ref[...]                                              # (Sq, D) bf16
    kvn = xn if is_self else kvn_ref[...]                         # (Sk, D) bf16

    scale = 1.0 / math.sqrt(d_k)
    # per-head projections (bf16 x bf16 -> f32 accumulate); K,V fused into one wide matmul
    q = (jnp.dot(xn, wq_ref[...], preferred_element_type=jnp.float32)
         + bq_ref[...]) * scale                                   # (Sq, d_k)
    kvp = (jnp.dot(kvn, wkv_ref[...], preferred_element_type=jnp.float32)
           + bkv_ref[...])                                        # (Sk, 2*d_k)
    k = kvp[:, :d_k]
    v = kvp[:, d_k:]

    scores = jax.lax.dot_general(
        q.astype(jnp.bfloat16), k.astype(jnp.bfloat16),
        (((1,), (1,)), ((), ())),
        preferred_element_type=jnp.float32)                       # (Sq, Sk)
    scores = scores + bias_ref[...]                               # masked_fill(-1e9) equivalent

    smax = jnp.max(scores, axis=-1, keepdims=True)
    p = jnp.exp(scores - smax)
    p = p * pl.reciprocal(jnp.sum(p, axis=-1, keepdims=True), approx=True)

    head = jnp.dot(p.astype(jnp.bfloat16), v.astype(jnp.bfloat16),
                   preferred_element_type=jnp.float32)            # (Sq, d_k)
    acc_ref[...] += jnp.dot(head.astype(jnp.bfloat16), wo_ref[...],
                            preferred_element_type=jnp.float32)   # head slice of Wo

    @pl.when(hi == h - 1)
    def _done():
        o_ref[0] = acc_ref[...].astype(o_ref.dtype)


def mha_residual(x, kv, mask, p, h, is_self_attn):
    B, Sq, D = x.shape
    Sk = Sq if is_self_attn else kv.shape[1]
    Mq = mask.shape[1]
    d_k = D // h
    assert D % h == 0
    assert (d_k % 128 == 0) or h == 1, "head dim must be lane-dense (multiple of 128)"
    # TODO(synk): fall back to full-width weight blocks when d_k < 128.

    kernel = functools.partial(_mha_res_kernel, h, d_k, is_self_attn)

    def rep(shape):
        return pl.BlockSpec(shape, lambda b, hi: (0,) * len(shape))

    in_specs = [pl.BlockSpec((1, Sq, D), lambda b, hi: (b, 0, 0))]
    inputs = [x]
    if not is_self_attn:
        in_specs.append(pl.BlockSpec((1, Sk, D), lambda b, hi: (b, 0, 0)))
        inputs.append(kv)
    in_specs += [
        pl.BlockSpec((1, Mq, Sk), lambda b, hi: (b, 0, 0)),       # mask
        rep((1, D)), rep((1, D)),                                 # layernorm gamma/beta
        pl.BlockSpec((D, d_k), lambda b, hi: (0, hi)),            # Wq  (per-head slice)
        pl.BlockSpec((1, d_k), lambda b, hi: (0, hi)),            # bq
        pl.BlockSpec((D, 2 * d_k), lambda b, hi: (0, hi)),        # fused [Wk|Wv] per head
        pl.BlockSpec((1, 2 * d_k), lambda b, hi: (0, hi)),        # fused [bk|bv]
        pl.BlockSpec((d_k, D), lambda b, hi: (hi, 0)),            # Wo  (per-head rows)
        rep((1, D)),                                              # bo
    ]
    inputs += [mask, p["ln_g"], p["ln_b"], p["wq"], p["bq"],
               p["wkv"], p["bkv"], p["wo"], p["bo"]]

    scratch = [pltpu.VMEM((Sq, D), jnp.float32),    # accumulator (residual + sum over heads)
               pltpu.VMEM((Sq, D), jnp.bfloat16)]   # cached norm(x)
    if not is_self_attn:
        scratch.append(pltpu.VMEM((Sk, D), jnp.bfloat16))   # cached bf16 memory
    scratch.append(pltpu.VMEM((Mq, Sk), jnp.float32))       # cached additive mask bias

    return pl.pallas_call(
        kernel,
        out_shape=jax.ShapeDtypeStruct((B, Sq, D), x.dtype),
        grid=(B, h),
        in_specs=in_specs,
        out_specs=pl.BlockSpec((1, Sq, D), lambda b, hi: (b, 0, 0)),
        scratch_shapes=scratch,
        compiler_params=pltpu.CompilerParams(
            dimension_semantics=("parallel", "arbitrary"),
            vmem_limit_bytes=_VMEM_LIMIT),
    )(*inputs)


# ---------------------------------------------------------------------------
# fused kernel: x + FeedForward(norm(x)) = x + W2 @ relu(W1 @ norm(x) + b1) + b2
#   grid = (B, d_ff // tff); the d_ff axis is a reduction into an f32 accumulator.
#   Optionally applies the decoder's final LayerNorm on the result (last layer).
# ---------------------------------------------------------------------------
def _ff_res_kernel(apply_final, *refs):
    if apply_final:
        (x_ref, g_ref, b_ref, w1_ref, b1_ref, w2_ref, b2_ref,
         fg_ref, fb_ref, o_ref, acc_ref, xn_ref) = refs
    else:
        (x_ref, g_ref, b_ref, w1_ref, b1_ref, w2_ref, b2_ref,
         o_ref, acc_ref, xn_ref) = refs

    ki = pl.program_id(1)

    @pl.when(ki == 0)
    def _init():
        x = x_ref[0].astype(jnp.float32)
        xn_ref[...] = _layernorm(x, g_ref[...], b_ref[...]).astype(jnp.bfloat16)
        acc_ref[...] = x + b2_ref[...]            # residual + final bias, added once

    h1 = (jnp.dot(xn_ref[...], w1_ref[...], preferred_element_type=jnp.float32)
          + b1_ref[...])
    h1 = jnp.maximum(h1, 0.0)                     # ReLU (mid dropout = identity)
    acc_ref[...] += jnp.dot(h1.astype(jnp.bfloat16), w2_ref[...],
                            preferred_element_type=jnp.float32)

    @pl.when(ki == pl.num_programs(1) - 1)
    def _done():
        y = acc_ref[...]
        if apply_final:
            y = _layernorm(y, fg_ref[...], fb_ref[...])
        o_ref[0] = y.astype(o_ref.dtype)


def _pick_ff_tile(d_ff):
    for t in (512, 256, 128):
        if d_ff % t == 0:
            return t
    return d_ff


def ff_residual(x, p, final_norm_params=None):
    B, S, D = x.shape
    Dff = p["w1"].shape[1]
    tff = _pick_ff_tile(Dff)
    n_ff = Dff // tff
    apply_final = final_norm_params is not None
    kernel = functools.partial(_ff_res_kernel, apply_final)

    def rep(shape):
        return pl.BlockSpec(shape, lambda b, k: (0,) * len(shape))

    in_specs = [
        pl.BlockSpec((1, S, D), lambda b, k: (b, 0, 0)),
        rep((1, D)), rep((1, D)),                              # layernorm gamma/beta
        pl.BlockSpec((D, tff), lambda b, k: (0, k)),           # W1 chunk
        pl.BlockSpec((1, tff), lambda b, k: (0, k)),           # b1 chunk
        pl.BlockSpec((tff, D), lambda b, k: (k, 0)),           # W2 chunk
        rep((1, D)),                                           # b2
    ]
    inputs = [x, p["ln_g"], p["ln_b"], p["w1"], p["b1"], p["w2"], p["b2"]]
    if apply_final:
        fg, fb = final_norm_params
        in_specs += [rep((1, D)), rep((1, D))]
        inputs += [fg, fb]

    return pl.pallas_call(
        kernel,
        out_shape=jax.ShapeDtypeStruct((B, S, D), x.dtype),
        grid=(B, n_ff),
        in_specs=in_specs,
        out_specs=pl.BlockSpec((1, S, D), lambda b, k: (b, 0, 0)),
        scratch_shapes=[pltpu.VMEM((S, D), jnp.float32),
                        pltpu.VMEM((S, D), jnp.bfloat16)],
        compiler_params=pltpu.CompilerParams(
            dimension_semantics=("parallel", "arbitrary"),
            vmem_limit_bytes=_VMEM_LIMIT),
    )(*inputs)


# ---------------------------------------------------------------------------
# Decoder forward (plain-JAX glue orchestrating the fused Pallas sublayer kernels)
# ---------------------------------------------------------------------------
def decoder_forward(x, m, src_mask, tgt_mask, params, h, self_attention=True):
    layers = params["layers"]
    assert layers, "expect N >= 1 decoder layers"
    for i, lp in enumerate(layers):
        if self_attention:
            x = mha_residual(x, None, tgt_mask, lp["self_attn"], h, is_self_attn=True)
        x = mha_residual(x, m, src_mask, lp["cross_attn"], h, is_self_attn=False)
        final = (params["final_g"], params["final_b"]) if i == len(layers) - 1 else None
        x = ff_residual(x, lp["ff"], final_norm_params=final)   # final norm fused on last layer
    return x


# ---------------------------------------------------------------------------
# deterministic parameter init (synthetic weights; no checkpoint load)
# ---------------------------------------------------------------------------
def init_decoder_params(key, d_model, d_ff, h, N, self_attention=True):
    d_k = d_model // h

    def linear(k, din, dout):
        kw, kb = jax.random.split(k)
        w = (jax.random.normal(kw, (din, dout), jnp.float32) * 0.02).astype(jnp.bfloat16)
        b = jax.random.normal(kb, (1, dout), jnp.float32) * 0.02
        return w, b

    def mha_params(k):
        ks = jax.random.split(k, 4)
        wq, bq = linear(ks[0], d_model, d_model)
        wk, bk = linear(ks[1], d_model, d_model)
        wv, bv = linear(ks[2], d_model, d_model)
        wo, bo = linear(ks[3], d_model, d_model)
        # fuse K/V column-wise, head-major layout: [head][k|v][d_k]
        wkv = jnp.stack([wk.reshape(d_model, h, d_k),
                         wv.reshape(d_model, h, d_k)], axis=2).reshape(d_model, 2 * d_model)
        bkv = jnp.stack([bk.reshape(1, h, d_k),
                         bv.reshape(1, h, d_k)], axis=2).reshape(1, 2 * d_model)
        return dict(wq=wq, bq=bq, wkv=wkv, bkv=bkv, wo=wo, bo=bo,
                    ln_g=jnp.ones((1, d_model), jnp.float32),
                    ln_b=jnp.zeros((1, d_model), jnp.float32))

    def ff_params(k):
        k1, k2 = jax.random.split(k)
        w1, b1 = linear(k1, d_model, d_ff)
        w2, b2 = linear(k2, d_ff, d_model)
        return dict(w1=w1, b1=b1, w2=w2, b2=b2,
                    ln_g=jnp.ones((1, d_model), jnp.float32),
                    ln_b=jnp.zeros((1, d_model), jnp.float32))

    layers = []
    for _ in range(N):
        k_self, k_cross, k_ff, key = jax.random.split(key, 4)
        layer = dict(cross_attn=mha_params(k_cross), ff=ff_params(k_ff))
        if self_attention:
            layer["self_attn"] = mha_params(k_self)
        layers.append(layer)
    return dict(layers=layers,
                final_g=jnp.ones((1, d_model), jnp.float32),
                final_b=jnp.zeros((1, d_model), jnp.float32))


# ---------------------------------------------------------------------------
# pure-JAX f32 reference (same bf16 weights, f32 activation math) for validation
# ---------------------------------------------------------------------------
def _ref_mha(xq, xkv, mask, p, h):
    B, Sq, D = xq.shape
    d_k = D // h
    wq = p["wq"].astype(jnp.float32)
    wkv = p["wkv"].astype(jnp.float32).reshape(D, h, 2, d_k)
    wk = wkv[:, :, 0, :].reshape(D, D)
    wv = wkv[:, :, 1, :].reshape(D, D)
    bkv = p["bkv"].reshape(1, h, 2, d_k)
    bk = bkv[:, :, 0, :].reshape(1, D)
    bv = bkv[:, :, 1, :].reshape(1, D)
    wo = p["wo"].astype(jnp.float32)

    q = xq @ wq + p["bq"]
    k = xkv @ wk + bk
    v = xkv @ wv + bv

    def split(t):
        return t.reshape(t.shape[0], t.shape[1], h, d_k).transpose(0, 2, 1, 3)

    qh, kh, vh = split(q), split(k), split(v)
    scores = jnp.einsum("bhqd,bhkd->bhqk", qh, kh) / math.sqrt(d_k)
    scores = jnp.where(mask[:, None, :, :] == 0.0, -1e9, scores)
    pattn = jax.nn.softmax(scores, axis=-1)
    out = jnp.einsum("bhqk,bhkd->bhqd", pattn, vh)
    out = out.transpose(0, 2, 1, 3).reshape(B, Sq, D)
    return out @ wo + p["bo"]


def _ref_decoder(x, m, src_mask, tgt_mask, params, h, self_attention=True):
    for lp in params["layers"]:
        if self_attention:
            sp = lp["self_attn"]
            xn = _layernorm(x, sp["ln_g"], sp["ln_b"])
            x = x + _ref_mha(xn, xn, tgt_mask, sp, h)
        cp = lp["cross_attn"]
        xn = _layernorm(x, cp["ln_g"], cp["ln_b"])
        x = x + _ref_mha(xn, m, src_mask, cp, h)
        fp = lp["ff"]
        xn = _layernorm(x, fp["ln_g"], fp["ln_b"])
        hid = jax.nn.relu(xn @ fp["w1"].astype(jnp.float32) + fp["b1"])
        x = x + (hid @ fp["w2"].astype(jnp.float32) + fp["b2"])
    return _layernorm(x, params["final_g"], params["final_b"])


# ---------------------------------------------------------------------------
if __name__ == "__main__":
    # lane-dense small config: D = 256 (multiple of 128), d_k = 128, d_ff = 512
    d_model, d_ff, h, N = 256, 512, 2, 2
    B, S_tgt, S_src = 2, 16, 16

    key = jax.random.PRNGKey(0)
    kx, km, kp = jax.random.split(key, 3)

    x = jax.random.normal(kx, (B, S_tgt, d_model), jnp.float32)   # output embedding
    m = jax.random.normal(km, (B, S_src, d_model), jnp.float32)   # encoder memory

    # src_mask: (B, 1, S_src) all-ones; tgt_mask: (B, S_tgt, S_tgt) causal lower-triangular
    src_mask = jnp.ones((B, 1, S_src), jnp.float32)
    tgt_mask = jnp.broadcast_to(
        jnp.tril(jnp.ones((S_tgt, S_tgt), jnp.float32))[None], (B, S_tgt, S_tgt))

    params = init_decoder_params(kp, d_model, d_ff, h, N, self_attention=True)

    out = decoder_forward(x, m, src_mask, tgt_mask, params, h, self_attention=True)
    jax.block_until_ready(out)
    assert out.shape == (B, S_tgt, d_model)

    ref = _ref_decoder(x, m, src_mask, tgt_mask, params, h, self_attention=True)
    max_err = float(jnp.max(jnp.abs(out - ref)))
    assert jnp.allclose(out, ref, atol=3e-2, rtol=3e-2), f"max abs err {max_err}"

    print("KERNEL_OK")
</pallas_src>

<mosaic_0001>
module attributes {stable_mosaic.version = 11 : i64} {
  func.func @_mha_res_kernel(%arg0: i32, %arg1: i32, %arg2: memref<1x16x256xf32, #tpu.memory_space<vmem>>, %arg3: memref<1x16x16xf32, #tpu.memory_space<vmem>>, %arg4: memref<1x256xf32, #tpu.memory_space<vmem>>, %arg5: memref<1x256xf32, #tpu.memory_space<vmem>>, %arg6: memref<256x128xbf16, #tpu.memory_space<vmem>>, %arg7: memref<1x128xf32, #tpu.memory_space<vmem>>, %arg8: memref<256x256xbf16, #tpu.memory_space<vmem>>, %arg9: memref<1x256xf32, #tpu.memory_space<vmem>>, %arg10: memref<128x256xbf16, #tpu.memory_space<vmem>>, %arg11: memref<1x256xf32, #tpu.memory_space<vmem>>, %arg12: memref<1x16x256xf32, #tpu.memory_space<vmem>>, %arg13: memref<16x256xf32, #tpu.memory_space<vmem>>, %arg14: memref<16x256xbf16, #tpu.memory_space<vmem>>, %arg15: memref<16x16xf32, #tpu.memory_space<vmem>>) attributes {dimension_semantics = [#tpu.dimension_semantics<parallel>, #tpu.dimension_semantics<arbitrary>], iteration_bounds = array<i64: 2, 2>, scalar_prefetch = 0 : i64, scratch_operands = 3 : i64, tpu.core_type = #tpu.core_type<tc>, window_params = [{transform_indices = @transform_0, window_bounds = array<i64: 1, 16, 256>}, {transform_indices = @transform_1, window_bounds = array<i64: 1, 16, 16>}, {pipeline_mode = #tpu.pipeline_mode<synchronous>, transform_indices = @transform_2, window_bounds = array<i64: 1, 256>}, {pipeline_mode = #tpu.pipeline_mode<synchronous>, transform_indices = @transform_3, window_bounds = array<i64: 1, 256>}, {transform_indices = @transform_4, window_bounds = array<i64: 256, 128>}, {transform_indices = @transform_5, window_bounds = array<i64: 1, 128>}, {transform_indices = @transform_6, window_bounds = array<i64: 256, 256>}, {transform_indices = @transform_7, window_bounds = array<i64: 1, 256>}, {transform_indices = @transform_8, window_bounds = array<i64: 128, 256>}, {pipeline_mode = #tpu.pipeline_mode<synchronous>, transform_indices = @transform_9, window_bounds = array<i64: 1, 256>}, {transform_indices = @transform_10, window_bounds = array<i64: 1, 16, 256>}]} {
    %c0_i32 = arith.constant 0 : i32
    %0 = arith.cmpi eq, %arg1, %c0_i32 : i32
    %1 = arith.extui %0 : i1 to i32
    %c0_i32_0 = arith.constant 0 : i32
    %2 = arith.cmpi ne, %1, %c0_i32_0 : i32
    scf.if %2 {
      %c0_26 = arith.constant 0 : index
      %c0_27 = arith.constant 0 : index
      %c0_28 = arith.constant 0 : index
      %45 = vector.load %arg2[%c0_26, %c0_27, %c0_28] : memref<1x16x256xf32, #tpu.memory_space<vmem>>, vector<1x16x256xf32>
      %46 = vector.shape_cast %45 : vector<1x16x256xf32> to vector<16x256xf32>
      %c0_29 = arith.constant 0 : index
      %c0_30 = arith.constant 0 : index
      %47 = vector.load %arg4[%c0_29, %c0_30] : memref<1x256xf32, #tpu.memory_space<vmem>>, vector<1x256xf32>
      %c0_31 = arith.constant 0 : index
      %c0_32 = arith.constant 0 : index
      %48 = vector.load %arg5[%c0_31, %c0_32] : memref<1x256xf32, #tpu.memory_space<vmem>>, vector<1x256xf32>
      %cst_33 = arith.constant dense<0.000000e+00> : vector<16xf32>
      %49 = vector.multi_reduction <add>, %46, %cst_33 [1] : vector<16x256xf32> to vector<16xf32>
      %50 = vector.shape_cast %49 : vector<16xf32> to vector<16x1xf32>
      %cst_34 = arith.constant 2.560000e+02 : f32
      %51 = vector.broadcast %cst_34 : f32 to vector<16x1xf32>
      %52 = arith.divf %50, %51 : vector<16x1xf32>
      %53 = vector.broadcast %52 : vector<16x1xf32> to vector<16x256xf32>
      %54 = arith.subf %46, %53 : vector<16x256xf32>
      %55 = arith.mulf %54, %54 : vector<16x256xf32>
      %cst_35 = arith.constant dense<0.000000e+00> : vector<16xf32>
      %56 = vector.multi_reduction <add>, %55, %cst_35 [1] : vector<16x256xf32> to vector<16xf32>
      %57 = vector.shape_cast %56 : vector<16xf32> to vector<16x1xf32>
      %cst_36 = arith.constant 2.560000e+02 : f32
      %58 = vector.broadcast %cst_36 : f32 to vector<16x1xf32>
      %59 = arith.divf %57, %58 : vector<16x1xf32>
      %60 = vector.broadcast %52 : vector<16x1xf32> to vector<16x256xf32>
      %61 = arith.subf %46, %60 : vector<16x256xf32>
      %cst_37 = arith.constant 9.99999974E-6 : f32
      %62 = vector.broadcast %cst_37 : f32 to vector<16x1xf32>
      %63 = arith.addf %59, %62 : vector<16x1xf32>
      %64 = math.rsqrt %63 : vector<16x1xf32>
      %65 = vector.broadcast %64 : vector<16x1xf32> to vector<16x256xf32>
      %66 = arith.mulf %61, %65 : vector<16x256xf32>
      %67 = vector.broadcast %47 : vector<1x256xf32> to vector<16x256xf32>
      %68 = arith.mulf %66, %67 : vector<16x256xf32>
      %69 = vector.broadcast %48 : vector<1x256xf32> to vector<16x256xf32>
      %70 = arith.addf %68, %69 : vector<16x256xf32>
      %71 = arith.truncf %70 : vector<16x256xf32> to vector<16x256xbf16>
      %c0_38 = arith.constant 0 : index
      %c0_39 = arith.constant 0 : index
      %72 = vector.load %arg14[%c0_38, %c0_39] : memref<16x256xbf16, #tpu.memory_space<vmem>>, vector<16x256xbf16>
      tpu.vector_store %arg14[%c0_38, %c0_39], %71 {strides = array<i32>} : memref<16x256xbf16, #tpu.memory_space<vmem>>, vector<16x256xbf16>,
      %c0_40 = arith.constant 0 : index
      %c0_41 = arith.constant 0 : index
      %c0_42 = arith.constant 0 : index
      %73 = vector.load %arg3[%c0_40, %c0_41, %c0_42] : memref<1x16x16xf32, #tpu.memory_space<vmem>>, vector<1x16x16xf32>
      %74 = vector.shape_cast %73 : vector<1x16x16xf32> to vector<16x16xf32>
      %cst_43 = arith.constant 0.000000e+00 : f32
      %75 = vector.broadcast %cst_43 : f32 to vector<16x16xf32>
      %76 = arith.cmpf oeq, %74, %75 : vector<16x16xf32>
      %cst_44 = arith.constant -1.000000e+09 : f32
      %cst_45 = arith.constant 0.000000e+00 : f32
      %77 = vector.broadcast %cst_44 : f32 to vector<16x16xf32>
      %78 = vector.broadcast %cst_45 : f32 to vector<16x16xf32>
      %79 = arith.select %76, %77, %78 : vector<16x16xi1>, vector<16x16xf32>
      %c0_46 = arith.constant 0 : index
      %c0_47 = arith.constant 0 : index
      %80 = vector.load %arg15[%c0_46, %c0_47] : memref<16x16xf32, #tpu.memory_space<vmem>>, vector<16x16xf32>
      tpu.vector_store %arg15[%c0_46, %c0_47], %79 {strides = array<i32>} : memref<16x16xf32, #tpu.memory_space<vmem>>, vector<16x16xf32>,
      %c0_48 = arith.constant 0 : index
      %c0_49 = arith.constant 0 : index
      %81 = vector.load %arg11[%c0_48, %c0_49] : memref<1x256xf32, #tpu.memory_space<vmem>>, vector<1x256xf32>
      %82 = vector.broadcast %81 : vector<1x256xf32> to vector<16x256xf32>
      %83 = arith.addf %46, %82 : vector<16x256xf32>
      %c0_50 = arith.constant 0 : index
      %c0_51 = arith.constant 0 : index
      %84 = vector.load %arg13[%c0_50, %c0_51] : memref<16x256xf32, #tpu.memory_space<vmem>>, vector<16x256xf32>
      tpu.vector_store %arg13[%c0_50, %c0_51], %83 {strides = array<i32>} : memref<16x256xf32, #tpu.memory_space<vmem>>, vector<16x256xf32>,
    } else {
    }
    %c0 = arith.constant 0 : index
    %c0_1 = arith.constant 0 : index
    %3 = vector.load %arg14[%c0, %c0_1] : memref<16x256xbf16, #tpu.memory_space<vmem>>, vector<16x256xbf16>
    %c0_2 = arith.constant 0 : index
    %c0_3 = arith.constant 0 : index
    %4 = vector.load %arg6[%c0_2, %c0_3] : memref<256x128xbf16, #tpu.memory_space<vmem>>, vector<256x128xbf16>
    %cst = arith.constant dense<0.000000e+00> : vector<16x128xf32>
    %5 = tpu.matmul %3, %4, %cst {dimension_numbers = #tpu.dot_dimension_numbers<[1], [0], [0], [1], [0, 0, 1, 1], [], []>} : vector<16x256xbf16>, vector<256x128xbf16>, vector<16x128xf32> -> vector<16x128xf32>
    %c0_4 = arith.constant 0 : index
    %c0_5 = arith.constant 0 : index
    %6 = vector.load %arg7[%c0_4, %c0_5] : memref<1x128xf32, #tpu.memory_space<vmem>>, vector<1x128xf32>
    %7 = vector.broadcast %6 : vector<1x128xf32> to vector<16x128xf32>
    %8 = arith.addf %5, %7 : vector<16x128xf32>
    %cst_6 = arith.constant 0.0883883461 : f32
    %9 = vector.broadcast %cst_6 : f32 to vector<16x128xf32>
    %10 = arith.mulf %8, %9 : vector<16x128xf32>
    %c0_7 = arith.constant 0 : index
    %c0_8 = arith.constant 0 : index
    %11 = vector.load %arg8[%c0_7, %c0_8] : memref<256x256xbf16, #tpu.memory_space<vmem>>, vector<256x256xbf16>
    %cst_9 = arith.constant dense<0.000000e+00> : vector<16x256xf32>
    %12 = tpu.matmul %3, %11, %cst_9 {dimension_numbers = #tpu.dot_dimension_numbers<[1], [0], [0], [1], [0, 0, 1, 1], [], []>} : vector<16x256xbf16>, vector<256x256xbf16>, vector<16x256xf32> -> vector<16x256xf32>
    %c0_10 = arith.constant 0 : index
    %c0_11 = arith.constant 0 : index
    %13 = vector.load %arg9[%c0_10, %c0_11] : memref<1x256xf32, #tpu.memory_space<vmem>>, vector<1x256xf32>
    %14 = vector.broadcast %13 : vector<1x256xf32> to vector<16x256xf32>
    %15 = arith.addf %12, %14 : vector<16x256xf32>
    %16 = vector.extract_strided_slice %15 {offsets = [0, 0], sizes = [16, 128], strides = [1, 1]} : vector<16x256xf32> to vector<16x128xf32>
    %17 = vector.extract_strided_slice %15 {offsets = [0, 128], sizes = [16, 128], strides = [1, 1]} : vector<16x256xf32> to vector<16x128xf32>
    %18 = arith.truncf %10 : vector<16x128xf32> to vector<16x128xbf16>
    %19 = arith.truncf %16 : vector<16x128xf32> to vector<16x128xbf16>
    %cst_12 = arith.constant dense<0.000000e+00> : vector<16x16xf32>
    %20 = tpu.matmul %18, %19, %cst_12 {dimension_numbers = #tpu.dot_dimension_numbers<[1], [1], [0], [0], [0, 0, 1, 0], [], []>} : vector<16x128xbf16>, vector<16x128xbf16>, vector<16x16xf32> -> vector<16x16xf32>
    %c0_13 = arith.constant 0 : index
    %c0_14 = arith.constant 0 : index
    %21 = vector.load %arg15[%c0_13, %c0_14] : memref<16x16xf32, #tpu.memory_space<vmem>>, vector<16x16xf32>
    %22 = arith.addf %20, %21 : vector<16x16xf32>
    %cst_15 = arith.constant dense<0xFF800000> : vector<16xf32>
    %23 = vector.multi_reduction <maximumf>, %22, %cst_15 [1] : vector<16x16xf32> to vector<16xf32>
    %24 = vector.shape_cast %23 : vector<16xf32> to vector<16x1xf32>
    %25 = vector.broadcast %24 : vector<16x1xf32> to vector<16x16xf32>
    %26 = arith.subf %22, %25 : vector<16x16xf32>
    %27 = math.exp %26 : vector<16x16xf32>
    %cst_16 = arith.constant dense<0.000000e+00> : vector<16xf32>
    %28 = vector.multi_reduction <add>, %27, %cst_16 [1] : vector<16x16xf32> to vector<16xf32>
    %29 = vector.shape_cast %28 : vector<16xf32> to vector<16x1xf32>
    %30 = tpu.reciprocal %29 {approx = true} : vector<16x1xf32> -> vector<16x1xf32>
    %31 = vector.broadcast %30 : vector<16x1xf32> to vector<16x16xf32>
    %32 = arith.mulf %27, %31 : vector<16x16xf32>
    %33 = arith.truncf %32 : vector<16x16xf32> to vector<16x16xbf16>
    %34 = arith.truncf %17 : vector<16x128xf32> to vector<16x128xbf16>
    %cst_17 = arith.constant dense<0.000000e+00> : vector<16x128xf32>
    %35 = tpu.matmul %33, %34, %cst_17 {dimension_numbers = #tpu.dot_dimension_numbers<[1], [0], [0], [1], [0, 0, 1, 1], [], []>} : vector<16x16xbf16>, vector<16x128xbf16>, vector<16x128xf32> -> vector<16x128xf32>
    %c0_18 = arith.constant 0 : index
    %c0_19 = arith.constant 0 : index
    %36 = vector.load %arg13[%c0_18, %c0_19] : memref<16x256xf32, #tpu.memory_space<vmem>>, vector<16x256xf32>
    %37 = arith.truncf %35 : vector<16x128xf32> to vector<16x128xbf16>
    %c0_20 = arith.constant 0 : index
    %c0_21 = arith.constant 0 : index
    %38 = vector.load %arg10[%c0_20, %c0_21] : memref<128x256xbf16, #tpu.memory_space<vmem>>, vector<128x256xbf16>
    %cst_22 = arith.constant dense<0.000000e+00> : vector<16x256xf32>
    %39 = tpu.matmul %37, %38, %cst_22 {dimension_numbers = #tpu.dot_dimension_numbers<[1], [0], [0], [1], [0, 0, 1, 1], [], []>} : vector<16x128xbf16>, vector<128x256xbf16>, vector<16x256xf32> -> vector<16x256xf32>
    %40 = arith.addf %36, %39 : vector<16x256xf32>
    %c0_23 = arith.constant 0 : index
    %c0_24 = arith.constant 0 : index
    %41 = vector.load %arg13[%c0_23, %c0_24] : memref<16x256xf32, #tpu.memory_space<vmem>>, vector<16x256xf32>
    tpu.vector_store %arg13[%c0_23, %c0_24], %40 {strides = array<i32>} : memref<16x256xf32, #tpu.memory_space<vmem>>, vector<16x256xf32>,
    %c1_i32 = arith.constant 1 : i32
    %42 = arith.cmpi eq, %arg1, %c1_i32 : i32
    %43 = arith.extui %42 : i1 to i32
    %c0_i32_25 = arith.constant 0 : i32
    %44 = arith.cmpi ne, %43, %c0_i32_25 : i32
    scf.if %44 {
      %c0_26 = arith.constant 0 : index
      %c0_27 = arith.constant 0 : index
      %45 = vector.load %arg13[%c0_26, %c0_27] : memref<16x256xf32, #tpu.memory_space<vmem>>, vector<16x256xf32>
      %c0_28 = arith.constant 0 : index
      %c0_29 = arith.constant 0 : index
      %c0_30 = arith.constant 0 : index
      %46 = vector.load %arg12[%c0_28, %c0_29, %c0_30] : memref<1x16x256xf32, #tpu.memory_space<vmem>>, vector<1x16x256xf32>
      %47 = vector.shape_cast %46 : vector<1x16x256xf32> to vector<16x256xf32>
      %48 = vector.shape_cast %45 : vector<16x256xf32> to vector<1x16x256xf32>
      tpu.vector_store %arg12[%c0_28, %c0_29, %c0_30], %48 {strides = array<i32>} : memref<1x16x256xf32, #tpu.memory_space<vmem>>, vector<1x16x256xf32>,
    } else {
    }
    return
  }
  func.func @transform_0(%arg0: i32, %arg1: i32) -> (i32, i32, i32) {
    %c0_i32 = arith.constant 0 : i32
    %c0_i32_0 = arith.constant 0 : i32
    %c0_i32_1 = arith.constant 0 : i32
    return %arg0, %c0_i32, %c0_i32_0 : i32, i32, i32
  }
  func.func @transform_1(%arg0: i32, %arg1: i32) -> (i32, i32, i32) {
    %c0_i32 = arith.constant 0 : i32
    %c0_i32_0 = arith.constant 0 : i32
    %c0_i32_1 = arith.constant 0 : i32
    return %arg0, %c0_i32, %c0_i32_0 : i32, i32, i32
  }
  func.func @transform_2(%arg0: i32, %arg1: i32) -> (i32, i32) {
    %c0_i32 = arith.constant 0 : i32
    %c0_i32_0 = arith.constant 0 : i32
    %c0_i32_1 = arith.constant 0 : i32
    return %c0_i32, %c0_i32_0 : i32, i32
  }
  func.func @transform_3(%arg0: i32, %arg1: i32) -> (i32, i32) {
    %c0_i32 = arith.constant 0 : i32
    %c0_i32_0 = arith.constant 0 : i32
    %c0_i32_1 = arith.constant 0 : i32
    return %c0_i32, %c0_i32_0 : i32, i32
  }
  func.func @transform_4(%arg0: i32, %arg1: i32) -> (i32, i32) {
    %c0_i32 = arith.constant 0 : i32
    %c0_i32_0 = arith.constant 0 : i32
    return %c0_i32, %arg1 : i32, i32
  }
  func.func @transform_5(%arg0: i32, %arg1: i32) -> (i32, i32) {
    %c0_i32 = arith.constant 0 : i32
    %c0_i32_0 = arith.constant 0 : i32
    return %c0_i32, %arg1 : i32, i32
  }
  func.func @transform_6(%arg0: i32, %arg1: i32) -> (i32, i32) {
    %c0_i32 = arith.constant 0 : i32
    %c0_i32_0 = arith.constant 0 : i32
    return %c0_i32, %arg1 : i32, i32
  }
  func.func @transform_7(%arg0: i32, %arg1: i32) -> (i32, i32) {
    %c0_i32 = arith.constant 0 : i32
    %c0_i32_0 = arith.constant 0 : i32
    return %c0_i32, %arg1 : i32, i32
  }
  func.func @transform_8(%arg0: i32, %arg1: i32) -> (i32, i32) {
    %c0_i32 = arith.constant 0 : i32
    %c0_i32_0 = arith.constant 0 : i32
    return %arg1, %c0_i32 : i32, i32
  }
  func.func @transform_9(%arg0: i32, %arg1: i32) -> (i32, i32) {
    %c0_i32 = arith.constant 0 : i32
    %c0_i32_0 = arith.constant 0 : i32
    %c0_i32_1 = arith.constant 0 : i32
    return %c0_i32, %c0_i32_0 : i32, i32
  }
  func.func @transform_10(%arg0: i32, %arg1: i32) -> (i32, i32, i32) {
    %c0_i32 = arith.constant 0 : i32
    %c0_i32_0 = arith.constant 0 : i32
    %c0_i32_1 = arith.constant 0 : i32
    return %arg0, %c0_i32, %c0_i32_0 : i32, i32, i32
  }
}

</mosaic_0001>

<llo_original>
// kernel: tpu_custom_call.1
$region0: #{tpu_custom_call.1}
  #allocation0 [shape = 'u32[]', space=smem, size = 0x4, offset = 0x4, fixed_abs, tag = 'smem constant byte address 0x4 - core index']
  #allocation1 [shape = 'u32[144,128]{1,0:T(1,128)}', space=vmem, size = 0x12000, scoped, tag = 'internal scratch']
  #allocation2 [shape = 'f32[16,256]{1,0:T(8,128)}', space=vmem, size = 0x4000, scoped, tag = 'scratch operand']
  #allocation3 [shape = 'bf16[16,256]{1,0:T(8,128)(2,1)}', space=vmem, size = 0x2000, scoped, tag = 'scratch operand']
  #allocation4 [shape = 'f32[16,16]{1,0:T(8,128)}', space=vmem, size = 0x2000, scoped, tag = 'scratch operand']
  %s0 = inlined_call_operand.hbm [shape: f32[2,16,256], index: 0, kind: input, shape index: {}]
  %s1 = inlined_call_operand.hbm [shape: f32[2,16,16], index: 1, kind: input, shape index: {}]
  %s2 = inlined_call_operand.vmem [shape: f32[1,256], index: 2, kind: input, shape index: {}]
  %s3 = inlined_call_operand.hbm [shape: f32[1,256], index: 3, kind: input, shape index: {}]
  %s4 = inlined_call_operand.hbm [shape: bf16[256,256], index: 4, kind: input, shape index: {}]
  %s5 = inlined_call_operand.vmem [shape: f32[1,256], index: 5, kind: input, shape index: {}]
  %s6 = inlined_call_operand.hbm [shape: bf16[256,512], index: 6, kind: input, shape index: {}]
  %s7 = inlined_call_operand.vmem [shape: f32[1,512], index: 7, kind: input, shape index: {}]
  %s8 = inlined_call_operand.hbm [shape: bf16[256,256], index: 8, kind: input, shape index: {}]
  %s9 = inlined_call_operand.vmem [shape: f32[1,256], index: 9, kind: input, shape index: {}]
  %s10 = inlined_call_operand.hbm [shape: f32[2,16,256], index: 10, kind: output, shape index: {}]
  %s11 = sld [smem:[#allocation0]]
  $region105: #{tpu_custom_call.1} parent=0
    _
  %s13 = ssub.s32 1, %s11
  %s14 = scalar_select 0, %s13, %s11
  $region1: #{tpu_custom_call.1} parent=0
    #allocation5 [shape = 'u8[32768]{0}', space=vmem, size = 0x8000, scoped, tag = 'input window, operand 0']
    #allocation6 [shape = 's32[2]{0}', space=sflag, size = 0x8, scoped, tag = 'scoped memory for tpu_custom_call.1']
    #allocation7 [shape = 's32[2]{0}', space=sflag, size = 0x8, scoped, tag = 'scoped memory for tpu_custom_call.1']
    #allocation8 [shape = 'u8[16384]{0}', space=vmem, size = 0x4000, scoped, tag = 'input window, operand 1']
    #allocation9 [shape = 's32[2]{0}', space=sflag, size = 0x8, scoped, tag = 'scoped memory for tpu_custom_call.1']
    #allocation10 [shape = 'u8[1024]{0}', space=vmem, size = 0x400, scoped, tag = 'input window, operand 3, single buffered']
    #allocation11 [shape = 'u8[131072]{0}', space=vmem, size = 0x20000, scoped, tag = 'input window, operand 4']
    #allocation12 [shape = 's32[2]{0}', space=sflag, size = 0x8, scoped, tag = 'scoped memory for tpu_custom_call.1']
    #allocation13 [shape = 'u8[262144]{0}', space=vmem, size = 0x40000, scoped, tag = 'input window, operand 6']
    #allocation14 [shape = 'u8[131072]{0}', space=vmem, size = 0x20000, scoped, tag = 'input window, operand 8']
    #allocation15 [shape = 's32[2]{0}', space=sflag, size = 0x8, scoped, tag = 'scoped memory for tpu_custom_call.1']
    #allocation16 [shape = 'u8[32768]{0}', space=vmem, size = 0x8000, scoped, tag = 'output window, operand 0']
    %15 = vsyncpa [#allocation6], 0
    %s16 = scalar_lea.sflag [#allocation6], 1
    %17 = vsyncpa %s16, 0
    %18 = vsyncpa [#allocation9], 0
    %s19 = scalar_lea.sflag [#allocation9], 1
    %20 = vsyncpa %s19, 0
    %21 = vsyncpa [#allocation12], 0
    %s22 = scalar_lea.sflag [#allocation12], 1
    %23 = vsyncpa %s22, 0
    %24 = vsyncpa [#allocation15], 0
    %s25 = scalar_lea.sflag [#allocation15], 1
    %26 = vsyncpa %s25, 0
    %27 = vsyncpa [#allocation7], 0
    %s28 = scalar_lea.sflag [#allocation7], 1
    %29 = vsyncpa %s28, 0
    loop: start=0, step=1, limit=6
    $region2: #{tpu_custom_call.1} parent=1 // loop_pre_header
      _
    $region3: #{tpu_custom_call.1} parent=1 // loop_header
      %s31 = sphi 0, %s35
      %p32 = scmp.ge.s32.totalorder %s31, 6
      %s38 = sphi 0, %s50
      %s39 = sphi 0, %s46
      %s40 = sphi 0, %s38
      %s41 = sphi 0, %s39
      %s42 = sphi 0, %s40
      %s43 = sphi 0, %s41
      %s53 = sphi 0, %s55
      %s56 = sphi 0, %s53
      %s57 = sphi 0, %s56
      %s73 = sphi 0, %s57
      %s79 = sphi 0, %s81
      %s82 = sphi 0, %s79
      %s83 = sphi 0, %s82
      %s99 = sphi 0, %s83
      %s103 = sphi 0, %s103
      %s105 = sphi 0, %s103
      %s106 = sphi 0, %s105
      %s120 = sphi 0, %s106
      %s124 = sphi 0, %s124
      %s126 = sphi 0, %s124
      %s127 = sphi 0, %s126
      %s141 = sphi 0, %s127
      %s147 = sphi 0, %s149
      %s150 = sphi 0, %s147
      %s151 = sphi 0, %s150
      %s167 = sphi 0, %s151
      %s173 = sphi 0, %s175
      %s176 = sphi 0, %s173
      %s177 = sphi 0, %s176
      %s193 = sphi 0, %s177
      %s199 = sphi 0, %s201
      %s202 = sphi 0, %s199
      %s203 = sphi 0, %s202
      %s219 = sphi 0, %s203
      %s225 = sphi 0, %s227
      %s228 = sphi 0, %s225
      %s229 = sphi 0, %s228
      %s245 = sphi 0, %s229
      %s251 = sphi 0, %s253
      %s254 = sphi 0, %s251
      %s255 = sphi 0, %s254
      %s271 = sphi 0, %s255
      %s275 = sphi 0, %s275
      %s277 = sphi 0, %s275
      %s278 = sphi 0, %s277
      %s292 = sphi 0, %s278
      %s298 = sphi 0, %s300
      %s301 = sphi 0, %s298
      %s302 = sphi 0, %s301
      %s318 = sphi 0, %s302
    $region4: #{tpu_custom_call.1} parent=1 // loop_header_branch
      %34 = sbr.rel (%p32) target = $region8
    $region5: #{tpu_custom_call.1} parent=1 // loop_body
      %s36 = ssub.s32 %s31, 1
      %s37 = ssub.s32 %s31, 2
      %s44 = sadd.s32 1, %s39
      %p45 = scmp.ge.s32.totalorder %s44, 2
      %s46 = scalar_select %p45, 0, %s44
      %s47 = sadd.s32 1, %s38
      %s48 = scalar_select %p45, %s47, %s38
      %p49 = scmp.ge.s32.totalorder %s48, 2
      %s50 = scalar_select %p49, 0, %s48
      %s51 = ssub.s32 %s38, %s50
      %p52 = scmp.eq.s32.totalorder %s51, 0
      %s54 = sadd.s32 %s53, 1
      %s55 = scalar_select %p52, %s53, %s54
      %p58 = pneg %p52
      %p59 = scmp.eq.s32.totalorder %s31, 3
      %p60 = por %p58, %p59
      %p61 = scmp.ne.s32.totalorder %s53, %s56
      %p62 = scmp.eq.s32.totalorder %s31, 0
      %p63 = por %p61, %p62
      %p64 = scmp.ne.s32.totalorder %s53, %s56
      %p65 = scmp.eq.s32.totalorder %s36, 3
      %p66 = por %p64, %p65
      %p67 = scmp.ne.s32.totalorder %s56, %s57
      %p68 = scmp.eq.s32.totalorder %s36, 0
      %p69 = por %p67, %p68
      %p70 = scmp.ne.s32.totalorder %s56, %s57
      %p71 = scmp.eq.s32.totalorder %s37, 3
      %p72 = por %p70, %p71
      %p74 = scmp.ne.s32.totalorder %s57, %s73
      %p75 = scmp.eq.s32.totalorder %s37, 0
      %p76 = por %p74, %p75
      %s77 = ssub.s32 %s38, %s50
      %p78 = scmp.eq.s32.totalorder %s77, 0
      %s80 = sadd.s32 %s79, 1
      %s81 = scalar_select %p78, %s79, %s80
      %p84 = pneg %p78
      %p85 = scmp.eq.s32.totalorder %s31, 3
      %p86 = por %p84, %p85
      %p87 = scmp.ne.s32.totalorder %s79, %s82
      %p88 = scmp.eq.s32.totalorder %s31, 0
      %p89 = por %p87, %p88
      %p90 = scmp.ne.s32.totalorder %s79, %s82
      %p91 = scmp.eq.s32.totalorder %s36, 3
      %p92 = por %p90, %p91
      %p93 = scmp.ne.s32.totalorder %s82, %s83
      %p94 = scmp.eq.s32.totalorder %s36, 0
      %p95 = por %p93, %p94
      %p96 = scmp.ne.s32.totalorder %s82, %s83
      %p97 = scmp.eq.s32.totalorder %s37, 3
      %p98 = por %p96, %p97
      %p100 = scmp.ne.s32.totalorder %s83, %s99
      %p101 = scmp.eq.s32.totalorder %s37, 0
      %p102 = por %p100, %p101
      %s104 = sadd.s32 %s103, 1
      %p107 = scmp.eq.s32.totalorder %s31, 3
      %p108 = scmp.ne.s32.totalorder %s103, %s105
      %p109 = scmp.eq.s32.totalorder %s31, 0
      %p110 = por %p108, %p109
      %p111 = scmp.ne.s32.totalorder %s103, %s105
      %p112 = scmp.eq.s32.totalorder %s36, 3
      %p113 = por %p111, %p112
      %p114 = scmp.ne.s32.totalorder %s105, %s106
      %p115 = scmp.eq.s32.totalorder %s36, 0
      %p116 = por %p114, %p115
      %p117 = scmp.ne.s32.totalorder %s105, %s106
      %p118 = scmp.eq.s32.totalorder %s37, 3
      %p119 = por %p117, %p118
      %p121 = scmp.ne.s32.totalorder %s106, %s120
      %p122 = scmp.eq.s32.totalorder %s37, 0
      %p123 = por %p121, %p122
      %s125 = sadd.s32 %s124, 1
      %p128 = scmp.eq.s32.totalorder %s31, 3
      %p129 = scmp.ne.s32.totalorder %s124, %s126
      %p130 = scmp.eq.s32.totalorder %s31, 0
      %p131 = por %p129, %p130
      %p132 = scmp.ne.s32.totalorder %s124, %s126
      %p133 = scmp.eq.s32.totalorder %s36, 3
      %p134 = por %p132, %p133
      %p135 = scmp.ne.s32.totalorder %s126, %s127
      %p136 = scmp.eq.s32.totalorder %s36, 0
      %p137 = por %p135, %p136
      %p138 = scmp.ne.s32.totalorder %s126, %s127
      %p139 = scmp.eq.s32.totalorder %s37, 3
      %p140 = por %p138, %p139
      %p142 = scmp.ne.s32.totalorder %s127, %s141
      %p143 = scmp.eq.s32.totalorder %s37, 0
      %p144 = por %p142, %p143
      %s145 = ssub.s32 %s39, %s46
      %p146 = scmp.eq.s32.totalorder %s145, 0
      %s148 = sadd.s32 %s147, 1
      %s149 = scalar_select %p146, %s147, %s148
      %p152 = pneg %p146
      %p153 = scmp.eq.s32.totalorder %s31, 3
      %p154 = por %p152, %p153
      %p155 = scmp.ne.s32.totalorder %s147, %s150
      %p156 = scmp.eq.s32.totalorder %s31, 0
      %p157 = por %p155, %p156
      %p158 = scmp.ne.s32.totalorder %s147, %s150
      %p159 = scmp.eq.s32.totalorder %s36, 3
      %p160 = por %p158, %p159
      %p161 = scmp.ne.s32.totalorder %s150, %s151
      %p162 = scmp.eq.s32.totalorder %s36, 0
      %p163 = por %p161, %p162
      %p164 = scmp.ne.s32.totalorder %s150, %s151
      %p165 = scmp.eq.s32.totalorder %s37, 3
      %p166 = por %p164, %p165
      %p168 = scmp.ne.s32.totalorder %s151, %s167
      %p169 = scmp.eq.s32.totalorder %s37, 0
      %p170 = por %p168, %p169
      %s171 = ssub.s32 %s39, %s46
      %p172 = scmp.eq.s32.totalorder %s171, 0
      %s174 = sadd.s32 %s173, 1
      %s175 = scalar_select %p172, %s173, %s174
      %p178 = pneg %p172
      %p179 = scmp.eq.s32.totalorder %s31, 3
      %p180 = por %p178, %p179
      %p181 = scmp.ne.s32.totalorder %s173, %s176
      %p182 = scmp.eq.s32.totalorder %s31, 0
      %p183 = por %p181, %p182
      %p184 = scmp.ne.s32.totalorder %s173, %s176
      %p185 = scmp.eq.s32.totalorder %s36, 3
      %p186 = por %p184, %p185
      %p187 = scmp.ne.s32.totalorder %s176, %s177
      %p188 = scmp.eq.s32.totalorder %s36, 0
      %p189 = por %p187, %p188
      %p190 = scmp.ne.s32.totalorder %s176, %s177
      %p191 = scmp.eq.s32.totalorder %s37, 3
      %p192 = por %p190, %p191
      %p194 = scmp.ne.s32.totalorder %s177, %s193
      %p195 = scmp.eq.s32.totalorder %s37, 0
      %p196 = por %p194, %p195
      %s197 = ssub.s32 %s39, %s46
      %p198 = scmp.eq.s32.totalorder %s197, 0
      %s200 = sadd.s32 %s199, 1
      %s201 = scalar_select %p198, %s199, %s200
      %p204 = pneg %p198
      %p205 = scmp.eq.s32.totalorder %s31, 3
      %p206 = por %p204, %p205
      %p207 = scmp.ne.s32.totalorder %s199, %s202
      %p208 = scmp.eq.s32.totalorder %s31, 0
      %p209 = por %p207, %p208
      %p210 = scmp.ne.s32.totalorder %s199, %s202
      %p211 = scmp.eq.s32.totalorder %s36, 3
      %p212 = por %p210, %p211
      %p213 = scmp.ne.s32.totalorder %s202, %s203
      %p214 = scmp.eq.s32.totalorder %s36, 0
      %p215 = por %p213, %p214
      %p216 = scmp.ne.s32.totalorder %s202, %s203
      %p217 = scmp.eq.s32.totalorder %s37, 3
      %p218 = por %p216, %p217
      %p220 = scmp.ne.s32.totalorder %s203, %s219
      %p221 = scmp.eq.s32.totalorder %s37, 0
      %p222 = por %p220, %p221
      %s223 = ssub.s32 %s39, %s46
      %p224 = scmp.eq.s32.totalorder %s223, 0
      %s226 = sadd.s32 %s225, 1
      %s227 = scalar_select %p224, %s225, %s226
      %p230 = pneg %p224
      %p231 = scmp.eq.s32.totalorder %s31, 3
      %p232 = por %p230, %p231
      %p233 = scmp.ne.s32.totalorder %s225, %s228
      %p234 = scmp.eq.s32.totalorder %s31, 0
      %p235 = por %p233, %p234
      %p236 = scmp.ne.s32.totalorder %s225, %s228
      %p237 = scmp.eq.s32.totalorder %s36, 3
      %p238 = por %p236, %p237
      %p239 = scmp.ne.s32.totalorder %s228, %s229
      %p240 = scmp.eq.s32.totalorder %s36, 0
      %p241 = por %p239, %p240
      %p242 = scmp.ne.s32.totalorder %s228, %s229
      %p243 = scmp.eq.s32.totalorder %s37, 3
      %p244 = por %p242, %p243
      %p246 = scmp.ne.s32.totalorder %s229, %s245
      %p247 = scmp.eq.s32.totalorder %s37, 0
      %p248 = por %p246, %p247
      %s249 = ssub.s32 %s39, %s46
      %p250 = scmp.eq.s32.totalorder %s249, 0
      %s252 = sadd.s32 %s251, 1
      %s253 = scalar_select %p250, %s251, %s252
      %p256 = pneg %p250
      %p257 = scmp.eq.s32.totalorder %s31, 3
      %p258 = por %p256, %p257
      %p259 = scmp.ne.s32.totalorder %s251, %s254
      %p260 = scmp.eq.s32.totalorder %s31, 0
      %p261 = por %p259, %p260
      %p262 = scmp.ne.s32.totalorder %s251, %s254
      %p263 = scmp.eq.s32.totalorder %s36, 3
      %p264 = por %p262, %p263
      %p265 = scmp.ne.s32.totalorder %s254, %s255
      %p266 = scmp.eq.s32.totalorder %s36, 0
      %p267 = por %p265, %p266
      %p268 = scmp.ne.s32.totalorder %s254, %s255
      %p269 = scmp.eq.s32.totalorder %s37, 3
      %p270 = por %p268, %p269
      %p272 = scmp.ne.s32.totalorder %s255, %s271
      %p273 = scmp.eq.s32.totalorder %s37, 0
      %p274 = por %p272, %p273
      %s276 = sadd.s32 %s275, 1
      %p279 = scmp.eq.s32.totalorder %s31, 3
      %p280 = scmp.ne.s32.totalorder %s275, %s277
      %p281 = scmp.eq.s32.totalorder %s31, 0
      %p282 = por %p280, %p281
      %p283 = scmp.ne.s32.totalorder %s275, %s277
      %p284 = scmp.eq.s32.totalorder %s36, 3
      %p285 = por %p283, %p284
      %p286 = scmp.ne.s32.totalorder %s277, %s278
      %p287 = scmp.eq.s32.totalorder %s36, 0
      %p288 = por %p286, %p287
      %p289 = scmp.ne.s32.totalorder %s277, %s278
      %p290 = scmp.eq.s32.totalorder %s37, 3
      %p291 = por %p289, %p290
      %p293 = scmp.ne.s32.totalorder %s278, %s292
      %p294 = scmp.eq.s32.totalorder %s37, 0
      %p295 = por %p293, %p294
      %s296 = ssub.s32 %s38, %s50
      %p297 = scmp.eq.s32.totalorder %s296, 0
      %s299 = sadd.s32 %s298, 1
      %s300 = scalar_select %p297, %s298, %s299
      %p303 = pneg %p297
      %p304 = scmp.eq.s32.totalorder %s31, 3
      %p305 = por %p303, %p304
      %p306 = scmp.ne.s32.totalorder %s298, %s301
      %p307 = scmp.eq.s32.totalorder %s31, 0
      %p308 = por %p306, %p307
      %p309 = scmp.ne.s32.totalorder %s298, %s301
      %p310 = scmp.eq.s32.totalorder %s36, 3
      %p311 = por %p309, %p310
      %p312 = scmp.ne.s32.totalorder %s301, %s302
      %p313 = scmp.eq.s32.totalorder %s36, 0
      %p314 = por %p312, %p313
      %p315 = scmp.ne.s32.totalorder %s301, %s302
      %p316 = scmp.eq.s32.totalorder %s37, 3
      %p317 = por %p315, %p316
      %p319 = scmp.ne.s32.totalorder %s302, %s318
      %p320 = scmp.eq.s32.totalorder %s37, 0
      %p321 = por %p319, %p320
      %p322 = scmp.le.s32.totalorder 1, %s31
      %p323 = scmp.lt.s32.totalorder %s31, 5
      %p324 = pnand %p322, %p323
      %p325 = pneg %p324
      // Predicated region
      $region9: #{tpu_custom_call.1} parent=5 // pred_check
        _
      $region10: #{tpu_custom_call.1} parent=5 // pred_check_branch
        %327 = sbr.rel (%p324) target = $region12
      $region11: #{tpu_custom_call.1} parent=5 // pred_region
        %s328 = ssub.s32 %s31, 1
        // Predicated region
        $region13: #{tpu_custom_call.1} parent=11 // pred_check
          %p329 = pneg %p116
        $region14: #{tpu_custom_call.1} parent=11 // pred_check_branch
          %331 = sbr.rel (%p329) target = $region16
        $region15: #{tpu_custom_call.1} parent=11 // pred_region
          _
        $region16: #{tpu_custom_call.1} parent=11 // pred_fallthru
          _
        // Predicated region
        $region17: #{tpu_custom_call.1} parent=11 // pred_check
          %p332 = pneg %p137
        $region18: #{tpu_custom_call.1} parent=11 // pred_check_branch
          %334 = sbr.rel (%p332) target = $region20
        $region19: #{tpu_custom_call.1} parent=11 // pred_region
          %s336 = ssub.s32 32, 32
          %337 = vsyncadd [#allocation9], %s336
          %s339 = sshll.u32 [#allocation10], 4
          %s340 = int_to_ptr.vmem [resolvable:$true] %s339
          %342 = dma.hbm_to_vmem [thread:$0]  %s3, 32, %s340, [#allocation9]
        $region20: #{tpu_custom_call.1} parent=11 // pred_fallthru
          _
        // Predicated region
        $region21: #{tpu_custom_call.1} parent=11 // pred_check
          %p343 = pneg %p288
        $region22: #{tpu_custom_call.1} parent=11 // pred_check_branch
          %345 = sbr.rel (%p343) target = $region24
        $region23: #{tpu_custom_call.1} parent=11 // pred_region
          _
        $region24: #{tpu_custom_call.1} parent=11 // pred_fallthru
          _
      $region12: #{tpu_custom_call.1} parent=5 // pred_fallthru
        _
      %p346 = scmp.lt.s32.totalorder %s31, 4
      // Predicated region
      $region25: #{tpu_custom_call.1} parent=5 // pred_check
        %p347 = pneg %p346
      $region26: #{tpu_custom_call.1} parent=5 // pred_check_branch
        %349 = sbr.rel (%p347) target = $region28
      $region27: #{tpu_custom_call.1} parent=5 // pred_region
        // Predicated region
        $region29: #{tpu_custom_call.1} parent=27 // pred_check
          %p350 = pneg %p63
        $region30: #{tpu_custom_call.1} parent=27 // pred_check_branch
          %352 = sbr.rel (%p350) target = $region32
        $region31: #{tpu_custom_call.1} parent=27 // pred_region
          %s353 = sand.u32 %s53, 1
          %s354 = scalar_lea.sflag [#allocation6], %s353
          %s355 = sand.u32 %s53, 1
          %s356 = smul.addr %s355, 32
          %s357 = scalar_lea.vmem [#allocation5], %s356
          %s359 = ssub.s32 512, 512
          %360 = vsyncadd %s354, %s359
          %s361 = smul.addr %s38, 4
          %s362 = smul.addr %s361, 128
          %s363 = scalar_lea.hbm %s0, %s362
          %s364 = sshll.u32 %s357, 4
          %s365 = int_to_ptr.vmem [resolvable:$true] %s364
          %370 = dma.hbm_to_vmem [thread:$0]  %s363, 512, %s365, %s354, 256, 256, 16
        $region32: #{tpu_custom_call.1} parent=27 // pred_fallthru
          _
        // Predicated region
        $region33: #{tpu_custom_call.1} parent=27 // pred_check
          %p371 = pneg %p89
        $region34: #{tpu_custom_call.1} parent=27 // pred_check_branch
          %373 = sbr.rel (%p371) target = $region36
        $region35: #{tpu_custom_call.1} parent=27 // pred_region
          %s374 = sand.u32 %s31, 1
          %s375 = scalar_lea.sflag [#allocation9], %s374
          %s376 = sand.u32 %s79, 1
          %s377 = smul.addr %s376, 16
          %s378 = scalar_lea.vmem [#allocation8], %s377
          %s380 = ssub.s32 256, 256
          %381 = vsyncadd %s375, %s380
          %s382 = smul.addr %s38, 2
          %s383 = smul.addr %s382, 128
          %s384 = scalar_lea.hbm %s1, %s383
          %s385 = sshll.u32 %s378, 4
          %s386 = int_to_ptr.vmem [resolvable:$true] %s385
          %391 = dma.hbm_to_vmem [thread:$0]  %s384, 256, %s386, %s375, 128, 128, 8
        $region36: #{tpu_custom_call.1} parent=27 // pred_fallthru
          _
        // Predicated region
        $region37: #{tpu_custom_call.1} parent=27 // pred_check
          %p392 = pneg %p157
        $region38: #{tpu_custom_call.1} parent=27 // pred_check_branch
          %394 = sbr.rel (%p392) target = $region40
        $region39: #{tpu_custom_call.1} parent=27 // pred_region
          %s395 = sand.u32 %s31, 1
          %s396 = scalar_lea.sflag [#allocation12], %s395
          %s397 = sand.u32 %s147, 1
          %s398 = smul.addr %s397, 128
          %s399 = scalar_lea.vmem [#allocation11], %s398
          %s401 = ssub.s32 2048, 2048
          %402 = vsyncadd %s396, %s401
          %s403 = smul.addr %s39, 64
          %s404 = scalar_lea.hbm %s4, %s403
          %s405 = sshll.u32 %s399, 4
          %s406 = int_to_ptr.vmem [resolvable:$true] %s405
          %411 = dma.hbm_to_vmem [thread:$0]  %s404, 2048, %s406, %s396, 128, 64, 4
        $region40: #{tpu_custom_call.1} parent=27 // pred_fallthru
          _
        // Predicated region
        $region41: #{tpu_custom_call.1} parent=27 // pred_check
          %p412 = pneg %p183
        $region42: #{tpu_custom_call.1} parent=27 // pred_check_branch
          %414 = sbr.rel (%p412) target = $region44
        $region43: #{tpu_custom_call.1} parent=27 // pred_region
          %p415 = scmp.lt.s32.totalorder %s39, 1
          %s416 = scalar_select %p415, %s39, 1
          %s417 = scalar_lea.vmem %s5, %s416
        $region44: #{tpu_custom_call.1} parent=27 // pred_fallthru
          _
        // Predicated region
        $region45: #{tpu_custom_call.1} parent=27 // pred_check
          %p418 = pneg %p209
        $region46: #{tpu_custom_call.1} parent=27 // pred_check_branch
          %420 = sbr.rel (%p418) target = $region48
        $region47: #{tpu_custom_call.1} parent=27 // pred_region
          %s421 = sand.u32 %s31, 1
          %s422 = scalar_lea.sflag [#allocation12], %s421
          %s423 = sand.u32 %s199, 1
          %s424 = smul.addr %s423, 256
          %s425 = scalar_lea.vmem [#allocation13], %s424
          %s426 = smul.u32 2, %s39
          %s428 = ssub.s32 4096, 4096
          %429 = vsyncadd %s422, %s428
          %s430 = smul.addr %s426, 64
          %s431 = scalar_lea.hbm %s6, %s430
          %s432 = sshll.u32 %s425, 4
          %s433 = int_to_ptr.vmem [resolvable:$true] %s432
          %438 = dma.hbm_to_vmem [thread:$0]  %s431, 4096, %s433, %s422, 256, 128, 8
        $region48: #{tpu_custom_call.1} parent=27 // pred_fallthru
          _
        // Predicated region
        $region49: #{tpu_custom_call.1} parent=27 // pred_check
          %p439 = pneg %p235
        $region50: #{tpu_custom_call.1} parent=27 // pred_check_branch
          %441 = sbr.rel (%p439) target = $region52
        $region51: #{tpu_custom_call.1} parent=27 // pred_region
          %s442 = smul.u32 2, %s39
          %p443 = scmp.lt.s32.totalorder %s442, 3
          %s444 = scalar_select %p443, %s442, 3
          %s445 = scalar_lea.vmem %s7, %s444
          %s446 = smul.u32 2, %s39
        $region52: #{tpu_custom_call.1} parent=27 // pred_fallthru
          _
        // Predicated region
        $region53: #{tpu_custom_call.1} parent=27 // pred_check
          %p447 = pneg %p261
        $region54: #{tpu_custom_call.1} parent=27 // pred_check_branch
          %449 = sbr.rel (%p447) target = $region56
        $region55: #{tpu_custom_call.1} parent=27 // pred_region
          %s450 = sand.u32 %s251, 1
          %s451 = scalar_lea.sflag [#allocation15], %s450
          %s452 = sand.u32 %s251, 1
          %s453 = smul.addr %s452, 128
          %s454 = scalar_lea.vmem [#allocation14], %s453
          %s455 = smul.u32 16, %s39
          %s457 = ssub.s32 2048, 2048
          %458 = vsyncadd %s451, %s457
          %s459 = smul.addr %s455, 2
          %s460 = smul.addr %s459, 64
          %s461 = scalar_lea.hbm %s8, %s460
          %s462 = sshll.u32 %s454, 4
          %s463 = int_to_ptr.vmem [resolvable:$true] %s462
          %468 = dma.hbm_to_vmem [thread:$0]  %s461, 2048, %s463, %s451, 128, 128, 8
        $region56: #{tpu_custom_call.1} parent=27 // pred_fallthru
          _
      $region28: #{tpu_custom_call.1} parent=5 // pred_fallthru
        _
      %p469 = scmp.le.s32.totalorder 1, %s31
      %p470 = scmp.lt.s32.totalorder %s31, 5
      %p471 = pnand %p469, %p470
      %p472 = pneg %p471
      // Predicated region
      $region57: #{tpu_custom_call.1} parent=5 // pred_check
        _
      $region58: #{tpu_custom_call.1} parent=5 // pred_check_branch
        %474 = sbr.rel (%p471) target = $region60
      $region59: #{tpu_custom_call.1} parent=5 // pred_region
        %s475 = ssub.s32 %s31, 1
        %s476 = sand.u32 %s56, 1
        %s477 = scalar_lea.sflag [#allocation6], %s476
        %s478 = sand.u32 %s56, 1
        %s479 = smul.addr %s478, 32
        %s480 = scalar_lea.vmem [#allocation5], %s479
        // Predicated region
        $region61: #{tpu_custom_call.1} parent=59 // pred_check
          %p481 = pneg %p69
        $region62: #{tpu_custom_call.1} parent=59 // pred_check_branch
          %483 = sbr.rel (%p481) target = $region64
        $region63: #{tpu_custom_call.1} parent=59 // pred_region
          %484 = dma.done %s477, 512
        $region64: #{tpu_custom_call.1} parent=59 // pred_fallthru
          _
        %s485 = sand.u32 %s36, 1
        %s486 = scalar_lea.sflag [#allocation9], %s485
        %s487 = sand.u32 %s82, 1
        %s488 = smul.addr %s487, 16
        %s489 = scalar_lea.vmem [#allocation8], %s488
        // Predicated region
        $region65: #{tpu_custom_call.1} parent=59 // pred_check
          %p490 = pneg %p95
        $region66: #{tpu_custom_call.1} parent=59 // pred_check_branch
          %492 = sbr.rel (%p490) target = $region68
        $region67: #{tpu_custom_call.1} parent=59 // pred_region
          %493 = dma.done %s486, 256
        $region68: #{tpu_custom_call.1} parent=59 // pred_fallthru
          _
        // Predicated region
        $region69: #{tpu_custom_call.1} parent=59 // pred_check
          %p494 = pneg %p137
        $region70: #{tpu_custom_call.1} parent=59 // pred_check_branch
          %496 = sbr.rel (%p494) target = $region72
        $region71: #{tpu_custom_call.1} parent=59 // pred_region
          %497 = dma.done [#allocation9], 32
        $region72: #{tpu_custom_call.1} parent=59 // pred_fallthru
          _
        %s498 = sand.u32 %s36, 1
        %s499 = scalar_lea.sflag [#allocation12], %s498
        %s500 = sand.u32 %s150, 1
        %s501 = smul.addr %s500, 128
        %s502 = scalar_lea.vmem [#allocation11], %s501
        // Predicated region
        $region73: #{tpu_custom_call.1} parent=59 // pred_check
          %p503 = pneg %p163
        $region74: #{tpu_custom_call.1} parent=59 // pred_check_branch
          %505 = sbr.rel (%p503) target = $region76
        $region75: #{tpu_custom_call.1} parent=59 // pred_region
          %506 = dma.done %s499, 2048
        $region76: #{tpu_custom_call.1} parent=59 // pred_fallthru
          _
        %s507 = sand.u32 %s36, 1
        %s508 = scalar_lea.sflag [#allocation12], %s507
        %s509 = sand.u32 %s202, 1
        %s510 = smul.addr %s509, 256
        %s511 = scalar_lea.vmem [#allocation13], %s510
        // Predicated region
        $region77: #{tpu_custom_call.1} parent=59 // pred_check
          %p512 = pneg %p215
        $region78: #{tpu_custom_call.1} parent=59 // pred_check_branch
          %514 = sbr.rel (%p512) target = $region80
        $region79: #{tpu_custom_call.1} parent=59 // pred_region
          %515 = dma.done %s508, 4096
        $region80: #{tpu_custom_call.1} parent=59 // pred_fallthru
          _
        %s516 = sand.u32 %s254, 1
        %s517 = scalar_lea.sflag [#allocation15], %s516
        %s518 = sand.u32 %s254, 1
        %s519 = smul.addr %s518, 128
        %s520 = scalar_lea.vmem [#allocation14], %s519
        // Predicated region
        $region81: #{tpu_custom_call.1} parent=59 // pred_check
          %p521 = pneg %p267
        $region82: #{tpu_custom_call.1} parent=59 // pred_check_branch
          %523 = sbr.rel (%p521) target = $region84
        $region83: #{tpu_custom_call.1} parent=59 // pred_region
          %524 = dma.done %s517, 2048
        $region84: #{tpu_custom_call.1} parent=59 // pred_fallthru
          _
        %s525 = sand.u32 %s56, 1
        %s526 = scalar_lea.sflag [#allocation6], %s525
        %s527 = sand.u32 %s56, 1
        %s528 = smul.addr %s527, 32
        %s529 = scalar_lea.vmem [#allocation5], %s528
        %p530 = pneg %p69
        %p531 = pneg %p66
        %s532 = sand.u32 %s36, 1
        %s533 = scalar_lea.sflag [#allocation9], %s532
        %s534 = sand.u32 %s82, 1
        %s535 = smul.addr %s534, 16
        %s536 = scalar_lea.vmem [#allocation8], %s535
        %p537 = pneg %p95
        %p538 = pneg %p92
        %p539 = pneg %p116
        %p540 = pneg %p113
        %p541 = pneg %p137
        %p542 = pneg %p134
        %s543 = sand.u32 %s36, 1
        %s544 = scalar_lea.sflag [#allocation12], %s543
        %s545 = sand.u32 %s150, 1
        %s546 = smul.addr %s545, 128
        %s547 = scalar_lea.vmem [#allocation11], %s546
        %p548 = pneg %p163
        %p549 = pneg %p160
        %p550 = scmp.lt.s32.totalorder %s41, 1
        %s551 = scalar_select %p550, %s41, 1
        %s552 = scalar_lea.vmem %s5, %s551
        %p553 = pneg %p189
        %p554 = pneg %p186
        %s555 = sand.u32 %s36, 1
        %s556 = scalar_lea.sflag [#allocation12], %s555
        %s557 = sand.u32 %s202, 1
        %s558 = smul.addr %s557, 256
        %s559 = scalar_lea.vmem [#allocation13], %s558
        %p560 = pneg %p215
        %p561 = pneg %p212
        %s562 = smul.u32 2, %s41
        %p563 = scmp.lt.s32.totalorder %s562, 3
        %s564 = scalar_select %p563, %s562, 3
        %s565 = scalar_lea.vmem %s7, %s564
        %p566 = pneg %p241
        %p567 = pneg %p238
        %s568 = sand.u32 %s254, 1
        %s569 = scalar_lea.sflag [#allocation15], %s568
        %s570 = sand.u32 %s254, 1
        %s571 = smul.addr %s570, 128
        %s572 = scalar_lea.vmem [#allocation14], %s571
        %p573 = pneg %p267
        %p574 = pneg %p264
        %p575 = pneg %p288
        %p576 = pneg %p285
        %p577 = pneg %p314
        %p578 = pneg %p311
        %s579 = sand.u32 %s301, 1
        %s580 = scalar_lea.sflag [#allocation7], %s579
        %s581 = sand.u32 %s301, 1
        %s582 = smul.addr %s581, 32
        %s583 = scalar_lea.vmem [#allocation16], %s582
        %p584 = scmp.lt.s32.totalorder %s41, 1
        %s585 = scalar_select %p584, %s41, 1
        %s586 = scalar_lea.vmem %s5, %s585
        %s587 = smul.u32 2, %s41
        %s588 = smul.u32 2, %s41
        %p589 = scmp.lt.s32.totalorder %s588, 3
        %s590 = scalar_select %p589, %s588, 3
        %s591 = scalar_lea.vmem %s7, %s590
        %s592 = smul.u32 2, %s41
        %s593 = smul.u32 16, %s41
        %p595 = scmp.eq.s32.totalorder %s41, 0
        // Predicated region
        $region85: #{tpu_custom_call.1} parent=59 // pred_check
          %p596 = pneg %p595
        $region86: #{tpu_custom_call.1} parent=59 // pred_check_branch
          %598 = sbr.rel (%p596) target = $region88
        $region87: #{tpu_custom_call.1} parent=59 // pred_region
          %v599 = vld [vmem:[%s480] sm:$0xff]
          %v600 = vld [vmem:[%s480 + $0x8] sm:$0xff]
          %v601 = vld [vmem:[%s480 + $0x10] sm:$0xff]
          %v602 = vld [vmem:[%s480 + $0x18] sm:$0xff]
          %v603 = vld [vmem:[%s2] sm:$0x3]
          %v604 = vld [vmem:[#allocation10] sm:$0x3]
          %v605 = vadd.f32 %v599, %v600
          %606 = vadd.xlane.f32.xlu0 %v605
          %v607 = vpop.xlane.xlu0 %606
          %v608 = vadd.f32 %v601, %v602
          %609 = vadd.xlane.f32.xlu0 %v608
          %v610 = vpop.xlane.xlu0 %609
          %v611 = vrcp.pop 256.0
          %v612 = vmul.f32 %v607, %v611
          %v613 = vmul.f32 %v610, %v611
          %v614 = vsub.f32 %v599, %v612
          %v615 = vsub.f32 %v600, %v612
          %v616 = vsub.f32 %v601, %v613
          %v617 = vsub.f32 %v602, %v613
          %v618 = vmul.f32 %v614, %v614
          %v619 = vmul.f32 %v615, %v615
          %v620 = vmul.f32 %v616, %v616
          %v621 = vmul.f32 %v617, %v617
          %v622 = vadd.f32 %v618, %v619
          %623 = vadd.xlane.f32.xlu0 %v622
          %v624 = vpop.xlane.xlu0 %623
          %v625 = vadd.f32 %v620, %v621
          %626 = vadd.xlane.f32.xlu0 %v625
          %v627 = vpop.xlane.xlu0 %626
          %v628 = vmul.f32 %v624, %v611
          %v629 = vmul.f32 %v627, %v611
          %v630 = vadd.f32 %v628, 1e-05
          %v631 = vadd.f32 %v629, 1e-05
          %v632 = vrsqrt.pop %v630
          %v633 = vrsqrt.pop %v631
          %v634 = vmul.f32 %v614, %v632
          %v635 = vmul.f32 %v615, %v632
          %v636 = vmul.f32 %v616, %v633
          %v637 = vmul.f32 %v617, %v633
          %v639 = vlaneseq
          %v640 = vshrl.u32 %v639, 7
          %v641 = vsub.s32 0, %v640
          %v642 = vrot.slane %v603, %v641
          %v643 = vlaneseq
          %v644 = vshrl.u32 %v643, 7
          %v645 = vsub.s32 1, %v644
          %v646 = vrot.slane %v603, %v645
          %v649 = vmul.f32 %v634, %v642
          %v650 = vmul.f32 %v635, %v646
          %v651 = vmul.f32 %v636, %v642
          %v652 = vmul.f32 %v637, %v646
          %v654 = vlaneseq
          %v655 = vshrl.u32 %v654, 7
          %v656 = vsub.s32 0, %v655
          %v657 = vrot.slane %v604, %v656
          %v658 = vlaneseq
          %v659 = vshrl.u32 %v658, 7
          %v660 = vsub.s32 1, %v659
          %v661 = vrot.slane %v604, %v660
          %v664 = vadd.f32 %v649, %v657
          %v665 = vadd.f32 %v650, %v661
          %v666 = vadd.f32 %v651, %v657
          %v667 = vadd.f32 %v652, %v661
          %v668 = vpack.c.bf16 %v666, %v664
          %v669 = vpack.c.bf16 %v667, %v665
          %v672 = vunpack.c.l.b16 %v668
          %v673 = vunpack.c.l.b16 %v669
          %v674 = vunpack.c.h.b16 %v668
          %v675 = vunpack.c.h.b16 %v669
          %v676 = vpack.c.b16 %v673, %v672
          %v677 = vpack.c.b16 %v675, %v674
          %680 = vst [vmem:[#allocation3] sm:$0xff] %v676
          %681 = vst [vmem:[#allocation3 + $0x8] sm:$0xff] %v677
          %v682 = vld [vmem:[%s489] sm:$0xff]
          %v683 = vld [vmem:[%s489 + $0x8] sm:$0xff]
          %vm684 = vcmp.eq.f32.partialorder %v682, 0.0
          %vm685 = vcmp.eq.f32.partialorder %v683, 0.0
          %v686 = vsel %vm684, -1e+09, 0.0
          %v687 = vsel %vm685, -1e+09, 0.0
          %vm688 = vcmask 130048
          %689 = vst.msk [vmem:[#allocation4] sm:$0xff] %vm688, %v686
          %690 = vst.msk [vmem:[#allocation4 + $0x8] sm:$0xff] %vm688, %v687
          %v691 = vld [vmem:[%s9] sm:$0x3]
          %v693 = vlaneseq
          %v694 = vshrl.u32 %v693, 7
          %v695 = vsub.s32 0, %v694
          %v696 = vrot.slane %v691, %v695
          %v697 = vlaneseq
          %v698 = vshrl.u32 %v697, 7
          %v699 = vsub.s32 1, %v698
          %v700 = vrot.slane %v691, %v699
          %v703 = vadd.f32 %v599, %v696
          %v704 = vadd.f32 %v600, %v700
          %v705 = vadd.f32 %v601, %v696
          %v706 = vadd.f32 %v602, %v700
          %707 = vst [vmem:[#allocation2] sm:$0xff] %v703
          %708 = vst [vmem:[#allocation2 + $0x8] sm:$0xff] %v704
          %709 = vst [vmem:[#allocation2 + $0x10] sm:$0xff] %v705
          %710 = vst [vmem:[#allocation2 + $0x18] sm:$0xff] %v706
        $region88: #{tpu_custom_call.1} parent=59 // pred_fallthru
          _
        %v711 = vld [vmem:[#allocation3] sm:$0xff]
        %v712 = vld [vmem:[#allocation3 + $0x8] sm:$0xff]
        %v713 = vld [vmem:[%s502] sm:$0xf]
        %v714 = vld [vmem:[%s502 + $0x4] sm:$0xf]
        %v715 = vld [vmem:[%s502 + $0x8] sm:$0xf]
        %v716 = vld [vmem:[%s502 + $0xc] sm:$0xf]
        %v717 = vld [vmem:[%s502 + $0x10] sm:$0xf]
        %v718 = vld [vmem:[%s502 + $0x14] sm:$0xf]
        %v719 = vld [vmem:[%s502 + $0x18] sm:$0xf]
        %v720 = vld [vmem:[%s502 + $0x1c] sm:$0xf]
        %v721 = vld [vmem:[%s502 + $0x20] sm:$0xf]
        %v722 = vld [vmem:[%s502 + $0x24] sm:$0xf]
        %v723 = vld [vmem:[%s502 + $0x28] sm:$0xf]
        %v724 = vld [vmem:[%s502 + $0x2c] sm:$0xf]
        %v725 = vld [vmem:[%s502 + $0x30] sm:$0xf]
        %v726 = vld [vmem:[%s502 + $0x34] sm:$0xf]
        %v727 = vld [vmem:[%s502 + $0x38] sm:$0xf]
        %v728 = vld [vmem:[%s502 + $0x3c] sm:$0xf]
        %v729 = vld [vmem:[%s502 + $0x40] sm:$0xf]
        %v730 = vld [vmem:[%s502 + $0x44] sm:$0xf]
        %v731 = vld [vmem:[%s502 + $0x48] sm:$0xf]
        %v732 = vld [vmem:[%s502 + $0x4c] sm:$0xf]
        %v733 = vld [vmem:[%s502 + $0x50] sm:$0xf]
        %v734 = vld [vmem:[%s502 + $0x54] sm:$0xf]
        %v735 = vld [vmem:[%s502 + $0x58] sm:$0xf]
        %v736 = vld [vmem:[%s502 + $0x5c] sm:$0xf]
        %v737 = vld [vmem:[%s502 + $0x60] sm:$0xf]
        %v738 = vld [vmem:[%s502 + $0x64] sm:$0xf]
        %v739 = vld [vmem:[%s502 + $0x68] sm:$0xf]
        %v740 = vld [vmem:[%s502 + $0x6c] sm:$0xf]
        %v741 = vld [vmem:[%s502 + $0x70] sm:$0xf]
        %v742 = vld [vmem:[%s502 + $0x74] sm:$0xf]
        %v743 = vld [vmem:[%s502 + $0x78] sm:$0xf]
        %v744 = vld [vmem:[%s502 + $0x7c] sm:$0xf]
        %v745 = vld [vmem:[%s586] sm:$0x1]
        %v747 = vlaneseq
        %v748 = vshrl.u32 %v747, 7
        %v749 = vsub.s32 0, %v748
        %v750 = vrot.slane %v745, %v749
        %v754 = vunpack.c.l.b16 %v711
        %v755 = vunpack.c.h.b16 %v711
        %v756 = vunpack.c.l.b16 %v712
        %v757 = vunpack.c.h.b16 %v712
        %v758 = vpack.c.b16 %v756, %v754
        %v759 = vpack.c.b16 %v757, %v755
        %v794 = vunpack.c.l.b16 %v713
        %v795 = vunpack.c.l.b16 %v714
        %v796 = vunpack.c.l.b16 %v715
        %v797 = vunpack.c.l.b16 %v716
        %v798 = vunpack.c.l.b16 %v717
        %v799 = vunpack.c.l.b16 %v718
        %v800 = vunpack.c.l.b16 %v719
        %v801 = vunpack.c.l.b16 %v720
        %v802 = vunpack.c.l.b16 %v721
        %v803 = vunpack.c.l.b16 %v722
        %v804 = vunpack.c.l.b16 %v723
        %v805 = vunpack.c.l.b16 %v724
        %v806 = vunpack.c.l.b16 %v725
        %v807 = vunpack.c.l.b16 %v726
        %v808 = vunpack.c.l.b16 %v727
        %v809 = vunpack.c.l.b16 %v728
        %v810 = vunpack.c.l.b16 %v729
        %v811 = vunpack.c.l.b16 %v730
        %v812 = vunpack.c.l.b16 %v731
        %v813 = vunpack.c.l.b16 %v732
        %v814 = vunpack.c.l.b16 %v733
        %v815 = vunpack.c.l.b16 %v734
        %v816 = vunpack.c.l.b16 %v735
        %v817 = vunpack.c.l.b16 %v736
        %v818 = vunpack.c.l.b16 %v737
        %v819 = vunpack.c.l.b16 %v738
        %v820 = vunpack.c.l.b16 %v739
        %v821 = vunpack.c.l.b16 %v740
        %v822 = vunpack.c.l.b16 %v741
        %v823 = vunpack.c.l.b16 %v742
        %v824 = vunpack.c.l.b16 %v743
        %v825 = vunpack.c.l.b16 %v744
        %v826 = vpack.c.b16 %v795, %v794
        %v827 = vpack.c.b16 %v797, %v796
        %v828 = vpack.c.b16 %v799, %v798
        %v829 = vpack.c.b16 %v801, %v800
        %v830 = vpack.c.b16 %v803, %v802
        %v831 = vpack.c.b16 %v805, %v804
        %v832 = vpack.c.b16 %v807, %v806
        %v833 = vpack.c.b16 %v809, %v808
        %v834 = vpack.c.b16 %v811, %v810
        %v835 = vpack.c.b16 %v813, %v812
        %v836 = vpack.c.b16 %v815, %v814
        %v837 = vpack.c.b16 %v817, %v816
        %v838 = vpack.c.b16 %v819, %v818
        %v839 = vpack.c.b16 %v821, %v820
        %v840 = vpack.c.b16 %v823, %v822
        %v841 = vpack.c.b16 %v825, %v824
        %858 = vmatprep.subr.bf16.mxu0 0
        %859 = vmatpush1.bf16.msra.mxu0 %v833
        %860 = vmatprep.subr.bf16.mxu0 0
        %861 = vmatpush1.bf16.msra.mxu0 %v832
        %862 = vmatprep.subr.bf16.mxu0 0
        %863 = vmatpush1.bf16.msra.mxu0 %v831
        %864 = vmatprep.subr.bf16.mxu0 0
        %865 = vmatpush1.bf16.msra.mxu0 %v830
        %866 = vmatprep.subr.bf16.mxu0 0
        %867 = vmatpush1.bf16.msra.mxu0 %v829
        %868 = vmatprep.subr.bf16.mxu0 0
        %869 = vmatpush1.bf16.msra.mxu0 %v828
        %870 = vmatprep.subr.bf16.mxu0 0
        %871 = vmatpush1.bf16.msra.mxu0 %v827
        %872 = vmatprep.subr.bf16.mxu0 0
        %873 = vmatpush1.bf16.msra.mxu0 %v826
        %874 = vmatprep.subr.bf16.mxu0 0
        %875 = vmatpush2.bf16.msra.mxu0 %v841
        %876 = vmatprep.subr.bf16.mxu0 0
        %877 = vmatpush2.bf16.msra.mxu0 %v840
        %878 = vmatprep.subr.bf16.mxu0 0
        %879 = vmatpush2.bf16.msra.mxu0 %v839
        %880 = vmatprep.subr.bf16.mxu0 0
        %881 = vmatpush2.bf16.msra.mxu0 %v838
        %882 = vmatprep.subr.bf16.mxu0 0
        %883 = vmatpush2.bf16.msra.mxu0 %v837
        %884 = vmatprep.subr.bf16.mxu0 0
        %885 = vmatpush2.bf16.msra.mxu0 %v836
        %886 = vmatprep.subr.bf16.mxu0 0
        %887 = vmatpush2.bf16.msra.mxu0 %v835
        %888 = vmatprep.subr.bf16.mxu0 0
        %889 = vmatpush2.bf16.msra.mxu0 %v834
        %890 = vmatprep.mubr.bf16.mxu0 %v759
        %891 = vmatmul.mubr.bf16.gmra.mxu0 %v758
        %v892 = vpop.f32.mrf.mxu0
        %v893 = vadd.f32 %v750, %v892
        %v894 = vpop.f32.mrf.mxu0
        %v895 = vpop.f32.mrf.mxu0
        %v896 = vadd.f32 %v750, %v895
        %v897 = vpop.f32.mrf.mxu0
        %898 = vdwg.mxu0
        %v899 = vmul.f32 %v893, 0.088388346
        %v900 = vmul.f32 %v896, 0.088388346
        %v901 = vld [vmem:[%s511] sm:$0xff]
        %v902 = vld [vmem:[%s511 + $0x8] sm:$0xff]
        %v903 = vld [vmem:[%s511 + $0x10] sm:$0xff]
        %v904 = vld [vmem:[%s511 + $0x18] sm:$0xff]
        %v905 = vld [vmem:[%s511 + $0x20] sm:$0xff]
        %v906 = vld [vmem:[%s511 + $0x28] sm:$0xff]
        %v907 = vld [vmem:[%s511 + $0x30] sm:$0xff]
        %v908 = vld [vmem:[%s511 + $0x38] sm:$0xff]
        %v909 = vld [vmem:[%s511 + $0x40] sm:$0xff]
        %v910 = vld [vmem:[%s511 + $0x48] sm:$0xff]
        %v911 = vld [vmem:[%s511 + $0x50] sm:$0xff]
        %v912 = vld [vmem:[%s511 + $0x58] sm:$0xff]
        %v913 = vld [vmem:[%s511 + $0x60] sm:$0xff]
        %v914 = vld [vmem:[%s511 + $0x68] sm:$0xff]
        %v915 = vld [vmem:[%s511 + $0x70] sm:$0xff]
        %v916 = vld [vmem:[%s511 + $0x78] sm:$0xff]
        %v917 = vld [vmem:[%s511 + $0x80] sm:$0xff]
        %v918 = vld [vmem:[%s511 + $0x88] sm:$0xff]
        %v919 = vld [vmem:[%s511 + $0x90] sm:$0xff]
        %v920 = vld [vmem:[%s511 + $0x98] sm:$0xff]
        %v921 = vld [vmem:[%s511 + $0xa0] sm:$0xff]
        %v922 = vld [vmem:[%s511 + $0xa8] sm:$0xff]
        %v923 = vld [vmem:[%s511 + $0xb0] sm:$0xff]
        %v924 = vld [vmem:[%s511 + $0xb8] sm:$0xff]
        %v925 = vld [vmem:[%s511 + $0xc0] sm:$0xff]
        %v926 = vld [vmem:[%s511 + $0xc8] sm:$0xff]
        %v927 = vld [vmem:[%s511 + $0xd0] sm:$0xff]
        %v928 = vld [vmem:[%s511 + $0xd8] sm:$0xff]
        %v929 = vld [vmem:[%s511 + $0xe0] sm:$0xff]
        %v930 = vld [vmem:[%s511 + $0xe8] sm:$0xff]
        %v931 = vld [vmem:[%s511 + $0xf0] sm:$0xff]
        %v932 = vld [vmem:[%s511 + $0xf8] sm:$0xff]
        %v933 = vld [vmem:[%s591] sm:$0x3]
        %v935 = vlaneseq
        %v936 = vshrl.u32 %v935, 7
        %v937 = vsub.s32 0, %v936
        %v938 = vrot.slane %v933, %v937
        %v939 = vlaneseq
        %v940 = vshrl.u32 %v939, 7
        %v941 = vsub.s32 1, %v940
        %v942 = vrot.slane %v933, %v941
        %v977 = vunpack.c.l.b16 %v901
        %v978 = vunpack.c.h.b16 %v901
        %v979 = vunpack.c.l.b16 %v902
        %v980 = vunpack.c.h.b16 %v902
        %v981 = vunpack.c.l.b16 %v903
        %v982 = vunpack.c.h.b16 %v903
        %v983 = vunpack.c.l.b16 %v904
        %v984 = vunpack.c.h.b16 %v904
        %v985 = vunpack.c.l.b16 %v905
        %v986 = vunpack.c.h.b16 %v905
        %v987 = vunpack.c.l.b16 %v906
        %v988 = vunpack.c.h.b16 %v906
        %v989 = vunpack.c.l.b16 %v907
        %v990 = vunpack.c.h.b16 %v907
        %v991 = vunpack.c.l.b16 %v908
        %v992 = vunpack.c.h.b16 %v908
        %v993 = vunpack.c.l.b16 %v909
        %v994 = vunpack.c.h.b16 %v909
        %v995 = vunpack.c.l.b16 %v910
        %v996 = vunpack.c.h.b16 %v910
        %v997 = vunpack.c.l.b16 %v911
        %v998 = vunpack.c.h.b16 %v911
        %v999 = vunpack.c.l.b16 %v912
        %v1000 = vunpack.c.h.b16 %v912
        %v1001 = vunpack.c.l.b16 %v913
        %v1002 = vunpack.c.h.b16 %v913
        %v1003 = vunpack.c.l.b16 %v914
        %v1004 = vunpack.c.h.b16 %v914
        %v1005 = vunpack.c.l.b16 %v915
        %v1006 = vunpack.c.h.b16 %v915
        %v1007 = vunpack.c.l.b16 %v916
        %v1008 = vunpack.c.h.b16 %v916
        %v1009 = vunpack.c.l.b16 %v917
        %v1010 = vunpack.c.h.b16 %v917
        %v1011 = vunpack.c.l.b16 %v918
        %v1012 = vunpack.c.h.b16 %v918
        %v1013 = vunpack.c.l.b16 %v919
        %v1014 = vunpack.c.h.b16 %v919
        %v1015 = vunpack.c.l.b16 %v920
        %v1016 = vunpack.c.h.b16 %v920
        %v1017 = vunpack.c.l.b16 %v921
        %v1018 = vunpack.c.h.b16 %v921
        %v1019 = vunpack.c.l.b16 %v922
        %v1020 = vunpack.c.h.b16 %v922
        %v1021 = vunpack.c.l.b16 %v923
        %v1022 = vunpack.c.h.b16 %v923
        %v1023 = vunpack.c.l.b16 %v924
        %v1024 = vunpack.c.h.b16 %v924
        %v1025 = vunpack.c.l.b16 %v925
        %v1026 = vunpack.c.h.b16 %v925
        %v1027 = vunpack.c.l.b16 %v926
        %v1028 = vunpack.c.h.b16 %v926
        %v1029 = vunpack.c.l.b16 %v927
        %v1030 = vunpack.c.h.b16 %v927
        %v1031 = vunpack.c.l.b16 %v928
        %v1032 = vunpack.c.h.b16 %v928
        %v1033 = vunpack.c.l.b16 %v929
        %v1034 = vunpack.c.h.b16 %v929
        %v1035 = vunpack.c.l.b16 %v930
        %v1036 = vunpack.c.h.b16 %v930
        %v1037 = vunpack.c.l.b16 %v931
        %v1038 = vunpack.c.h.b16 %v931
        %v1039 = vunpack.c.l.b16 %v932
        %v1040 = vunpack.c.h.b16 %v932
        %v1041 = vpack.c.b16 %v979, %v977
        %v1042 = vpack.c.b16 %v980, %v978
        %v1043 = vpack.c.b16 %v983, %v981
        %v1044 = vpack.c.b16 %v984, %v982
        %v1045 = vpack.c.b16 %v987, %v985
        %v1046 = vpack.c.b16 %v988, %v986
        %v1047 = vpack.c.b16 %v991, %v989
        %v1048 = vpack.c.b16 %v992, %v990
        %v1049 = vpack.c.b16 %v995, %v993
        %v1050 = vpack.c.b16 %v996, %v994
        %v1051 = vpack.c.b16 %v999, %v997
        %v1052 = vpack.c.b16 %v1000, %v998
        %v1053 = vpack.c.b16 %v1003, %v1001
        %v1054 = vpack.c.b16 %v1004, %v1002
        %v1055 = vpack.c.b16 %v1007, %v1005
        %v1056 = vpack.c.b16 %v1008, %v1006
        %v1057 = vpack.c.b16 %v1011, %v1009
        %v1058 = vpack.c.b16 %v1012, %v1010
        %v1059 = vpack.c.b16 %v1015, %v1013
        %v1060 = vpack.c.b16 %v1016, %v1014
        %v1061 = vpack.c.b16 %v1019, %v1017
        %v1062 = vpack.c.b16 %v1020, %v1018
        %v1063 = vpack.c.b16 %v1023, %v1021
        %v1064 = vpack.c.b16 %v1024, %v1022
        %v1065 = vpack.c.b16 %v1027, %v1025
        %v1066 = vpack.c.b16 %v1028, %v1026
        %v1067 = vpack.c.b16 %v1031, %v1029
        %v1068 = vpack.c.b16 %v1032, %v1030
        %v1069 = vpack.c.b16 %v1035, %v1033
        %v1070 = vpack.c.b16 %v1036, %v1034
        %v1071 = vpack.c.b16 %v1039, %v1037
        %v1072 = vpack.c.b16 %v1040, %v1038
        %1105 = vmatprep.subr.bf16.mxu0 %v1056
        %1106 = vmatpush1.bf16.msra.mxu0 %v1055
        %1107 = vmatprep.subr.bf16.mxu0 %v1054
        %1108 = vmatpush1.bf16.msra.mxu0 %v1053
        %1109 = vmatprep.subr.bf16.mxu0 %v1052
        %1110 = vmatpush1.bf16.msra.mxu0 %v1051
        %1111 = vmatprep.subr.bf16.mxu0 %v1050
        %1112 = vmatpush1.bf16.msra.mxu0 %v1049
        %1113 = vmatprep.subr.bf16.mxu0 %v1048
        %1114 = vmatpush1.bf16.msra.mxu0 %v1047
        %1115 = vmatprep.subr.bf16.mxu0 %v1046
        %1116 = vmatpush1.bf16.msra.mxu0 %v1045
        %1117 = vmatprep.subr.bf16.mxu0 %v1044
        %1118 = vmatpush1.bf16.msra.mxu0 %v1043
        %1119 = vmatprep.subr.bf16.mxu0 %v1042
        %1120 = vmatpush1.bf16.msra.mxu0 %v1041
        %1121 = vmatprep.subr.bf16.mxu0 %v1072
        %1122 = vmatpush2.bf16.msra.mxu0 %v1071
        %1123 = vmatprep.subr.bf16.mxu0 %v1070
        %1124 = vmatpush2.bf16.msra.mxu0 %v1069
        %1125 = vmatprep.subr.bf16.mxu0 %v1068
        %1126 = vmatpush2.bf16.msra.mxu0 %v1067
        %1127 = vmatprep.subr.bf16.mxu0 %v1066
        %1128 = vmatpush2.bf16.msra.mxu0 %v1065
        %1129 = vmatprep.subr.bf16.mxu0 %v1064
        %1130 = vmatpush2.bf16.msra.mxu0 %v1063
        %1131 = vmatprep.subr.bf16.mxu0 %v1062
        %1132 = vmatpush2.bf16.msra.mxu0 %v1061
        %1133 = vmatprep.subr.bf16.mxu0 %v1060
        %1134 = vmatpush2.bf16.msra.mxu0 %v1059
        %1135 = vmatprep.subr.bf16.mxu0 %v1058
        %1136 = vmatpush2.bf16.msra.mxu0 %v1057
        %1137 = vmatprep.mubr.bf16.mxu0 %v759
        %1138 = vmatmul.mubr.bf16.gmra.mxu0 %v758
        %v1139 = vpop.f32.mrf.mxu0
        %v1140 = vadd.f32 %v938, %v1139
        %v1141 = vpop.f32.mrf.mxu0
        %v1142 = vadd.f32 %v942, %v1141
        %v1143 = vpop.f32.mrf.mxu0
        %v1144 = vadd.f32 %v938, %v1143
        %v1145 = vpop.f32.mrf.mxu0
        %v1146 = vadd.f32 %v942, %v1145
        %1147 = vdwg.mxu0
        %v1148 = vpack.c.bf16 %v900, %v899
        %v1149 = vpack.c.bf16 %v1144, %v1140
        %v1150 = vld [vmem:[#allocation4] sm:$0xff]
        %v1151 = vld [vmem:[#allocation4 + $0x8] sm:$0xff]
        %1152 = vmatprep.subr.bf16.mxu0 0
        %1153 = vmatpush1.bf16.xpose.msra.mxu0 0
        %1154 = vmatprep.subr.bf16.mxu0 0
        %1155 = vmatpush1.bf16.xpose.msra.mxu0 0
        %1156 = vmatprep.subr.bf16.mxu0 0
        %1157 = vmatpush1.bf16.xpose.msra.mxu0 0
        %1158 = vmatprep.subr.bf16.mxu0 0
        %1159 = vmatpush1.bf16.xpose.msra.mxu0 0
        %1160 = vmatprep.subr.bf16.mxu0 0
        %1161 = vmatpush1.bf16.xpose.msra.mxu0 0
        %1162 = vmatprep.subr.bf16.mxu0 0
        %1163 = vmatpush1.bf16.xpose.msra.mxu0 0
        %1164 = vmatprep.subr.bf16.mxu0 0
        %1165 = vmatpush1.bf16.xpose.msra.mxu0 0
        %1166 = vmatprep.subr.bf16.mxu0 0
        %1167 = vmatpush1.bf16.xpose.msra.mxu0 %v1149
        %1168 = vmatprep.subr.bf16.mxu0 0
        %1169 = vmatpush2.bf16.xpose.msra.mxu0 0
        %1170 = vmatprep.subr.bf16.mxu0 0
        %1171 = vmatpush2.bf16.xpose.msra.mxu0 0
        %1172 = vmatprep.subr.bf16.mxu0 0
        %1173 = vmatpush2.bf16.xpose.msra.mxu0 0
        %1174 = vmatprep.subr.bf16.mxu0 0
        %1175 = vmatpush2.bf16.xpose.msra.mxu0 0
        %1176 = vmatprep.subr.bf16.mxu0 0
        %1177 = vmatpush2.bf16.xpose.msra.mxu0 0
        %1178 = vmatprep.subr.bf16.mxu0 0
        %1179 = vmatpush2.bf16.xpose.msra.mxu0 0
        %1180 = vmatprep.subr.bf16.mxu0 0
        %1181 = vmatpush2.bf16.xpose.msra.mxu0 0
        %1182 = vmatprep.subr.bf16.mxu0 0
        %1183 = vmatpush2.bf16.xpose.msra.mxu0 0
        %1184 = vmatprep.mubr.bf16.mxu0 0
        %1185 = vmatmul.mubr.bf16.gmra.mxu0 %v1148
        %v1186 = vpop.f32.mrf.mxu0
        %v1187 = vadd.f32 %v1150, %v1186
        %v1188 = vpop.f32.mrf.mxu0
        %v1189 = vpop.f32.mrf.mxu0
        %v1190 = vadd.f32 %v1151, %v1189
        %v1191 = vpop.f32.mrf.mxu0
        %1192 = vdwg.mxu0
        %vm1193 = vcmask 130048
        %v1194 = vsel %vm1193, %v1187, -inf
        %1195 = vmax.xlane.f32.xlu0 %v1194
        %v1196 = vpop.xlane.xlu0 %1195
        %v1197 = vsel %vm1193, %v1190, -inf
        %1198 = vmax.xlane.f32.xlu0 %v1197
        %v1199 = vpop.xlane.xlu0 %1198
        %v1200 = vsub.f32 %v1187, %v1196
        %v1201 = vsub.f32 %v1190, %v1199
        %v1202 = vmul.f32 %v1200, 1.442695
        %v1203 = vpow.pop %v1202
        %v1204 = vmul.f32 %v1201, 1.442695
        %v1205 = vpow.pop %v1204
        %v1206 = vsel %vm1193, %v1203, 0.0
        %1207 = vadd.xlane.f32.xlu0 %v1206
        %v1208 = vpop.xlane.xlu0 %1207
        %v1209 = vsel %vm1193, %v1205, 0.0
        %1210 = vadd.xlane.f32.xlu0 %v1209
        %v1211 = vpop.xlane.xlu0 %1210
        %v1212 = vrcp.pop %v1208
        %v1213 = vrcp.pop %v1211
        %v1214 = vmul.f32 %v1203, %v1212
        %v1215 = vmul.f32 %v1205, %v1213
        %v1216 = vpack.c.bf16 %v1215, %v1214
        %v1217 = vpack.c.bf16 %v1146, %v1142
        %v1219 = vsel %vm1193, %v1216, 0
        %1221 = vmatprep.subr.bf16.mxu0 0
        %1222 = vmatpush1.bf16.msra.mxu0 0
        %1223 = vmatprep.subr.bf16.mxu0 0
        %1224 = vmatpush1.bf16.msra.mxu0 0
        %1225 = vmatprep.subr.bf16.mxu0 0
        %1226 = vmatpush1.bf16.msra.mxu0 0
        %1227 = vmatprep.subr.bf16.mxu0 0
        %1228 = vmatpush1.bf16.msra.mxu0 0
        %1229 = vmatprep.subr.bf16.mxu0 0
        %1230 = vmatpush1.bf16.msra.mxu0 0
        %1231 = vmatprep.subr.bf16.mxu0 0
        %1232 = vmatpush1.bf16.msra.mxu0 0
        %1233 = vmatprep.subr.bf16.mxu0 0
        %1234 = vmatpush1.bf16.msra.mxu0 0
        %1235 = vmatprep.subr.bf16.mxu0 0
        %1236 = vmatpush1.bf16.msra.mxu0 %v1217
        %1237 = vmatprep.subr.bf16.mxu0 0
        %1238 = vmatpush2.bf16.msra.mxu0 0
        %1239 = vmatprep.subr.bf16.mxu0 0
        %1240 = vmatpush2.bf16.msra.mxu0 0
        %1241 = vmatprep.subr.bf16.mxu0 0
        %1242 = vmatpush2.bf16.msra.mxu0 0
        %1243 = vmatprep.subr.bf16.mxu0 0
        %1244 = vmatpush2.bf16.msra.mxu0 0
        %1245 = vmatprep.subr.bf16.mxu0 0
        %1246 = vmatpush2.bf16.msra.mxu0 0
        %1247 = vmatprep.subr.bf16.mxu0 0
        %1248 = vmatpush2.bf16.msra.mxu0 0
        %1249 = vmatprep.subr.bf16.mxu0 0
        %1250 = vmatpush2.bf16.msra.mxu0 0
        %1251 = vmatprep.subr.bf16.mxu0 0
        %1252 = vmatpush2.bf16.msra.mxu0 0
        %1253 = vmatprep.mubr.bf16.mxu0 0
        %1254 = vmatmul.mubr.bf16.gmra.mxu0 %v1219
        %v1255 = vpop.f32.mrf.mxu0
        %v1256 = vadd.f32 0.0, %v1255
        %v1257 = vpop.f32.mrf.mxu0
        %v1258 = vpop.f32.mrf.mxu0
        %v1259 = vadd.f32 0.0, %v1258
        %v1260 = vpop.f32.mrf.mxu0
        %1261 = vdwg.mxu0
        %v1262 = vld [vmem:[#allocation2] sm:$0xff]
        %v1263 = vld [vmem:[#allocation2 + $0x8] sm:$0xff]
        %v1264 = vld [vmem:[#allocation2 + $0x10] sm:$0xff]
        %v1265 = vld [vmem:[#allocation2 + $0x18] sm:$0xff]
        %v1266 = vpack.c.bf16 %v1259, %v1256
        %v1267 = vld [vmem:[%s520] sm:$0xff]
        %v1268 = vld [vmem:[%s520 + $0x8] sm:$0xff]
        %v1269 = vld [vmem:[%s520 + $0x10] sm:$0xff]
        %v1270 = vld [vmem:[%s520 + $0x18] sm:$0xff]
        %v1271 = vld [vmem:[%s520 + $0x20] sm:$0xff]
        %v1272 = vld [vmem:[%s520 + $0x28] sm:$0xff]
        %v1273 = vld [vmem:[%s520 + $0x30] sm:$0xff]
        %v1274 = vld [vmem:[%s520 + $0x38] sm:$0xff]
        %v1275 = vld [vmem:[%s520 + $0x40] sm:$0xff]
        %v1276 = vld [vmem:[%s520 + $0x48] sm:$0xff]
        %v1277 = vld [vmem:[%s520 + $0x50] sm:$0xff]
        %v1278 = vld [vmem:[%s520 + $0x58] sm:$0xff]
        %v1279 = vld [vmem:[%s520 + $0x60] sm:$0xff]
        %v1280 = vld [vmem:[%s520 + $0x68] sm:$0xff]
        %v1281 = vld [vmem:[%s520 + $0x70] sm:$0xff]
        %v1282 = vld [vmem:[%s520 + $0x78] sm:$0xff]
        %v1299 = vunpack.c.l.b16 %v1267
        %v1300 = vunpack.c.h.b16 %v1267
        %v1301 = vunpack.c.l.b16 %v1268
        %v1302 = vunpack.c.h.b16 %v1268
        %v1303 = vunpack.c.l.b16 %v1269
        %v1304 = vunpack.c.h.b16 %v1269
        %v1305 = vunpack.c.l.b16 %v1270
        %v1306 = vunpack.c.h.b16 %v1270
        %v1307 = vunpack.c.l.b16 %v1271
        %v1308 = vunpack.c.h.b16 %v1271
        %v1309 = vunpack.c.l.b16 %v1272
        %v1310 = vunpack.c.h.b16 %v1272
        %v1311 = vunpack.c.l.b16 %v1273
        %v1312 = vunpack.c.h.b16 %v1273
        %v1313 = vunpack.c.l.b16 %v1274
        %v1314 = vunpack.c.h.b16 %v1274
        %v1315 = vunpack.c.l.b16 %v1275
        %v1316 = vunpack.c.h.b16 %v1275
        %v1317 = vunpack.c.l.b16 %v1276
        %v1318 = vunpack.c.h.b16 %v1276
        %v1319 = vunpack.c.l.b16 %v1277
        %v1320 = vunpack.c.h.b16 %v1277
        %v1321 = vunpack.c.l.b16 %v1278
        %v1322 = vunpack.c.h.b16 %v1278
        %v1323 = vunpack.c.l.b16 %v1279
        %v1324 = vunpack.c.h.b16 %v1279
        %v1325 = vunpack.c.l.b16 %v1280
        %v1326 = vunpack.c.h.b16 %v1280
        %v1327 = vunpack.c.l.b16 %v1281
        %v1328 = vunpack.c.h.b16 %v1281
        %v1329 = vunpack.c.l.b16 %v1282
        %v1330 = vunpack.c.h.b16 %v1282
        %v1331 = vpack.c.b16 %v1301, %v1299
        %v1332 = vpack.c.b16 %v1302, %v1300
        %v1333 = vpack.c.b16 %v1305, %v1303
        %v1334 = vpack.c.b16 %v1306, %v1304
        %v1335 = vpack.c.b16 %v1309, %v1307
        %v1336 = vpack.c.b16 %v1310, %v1308
        %v1337 = vpack.c.b16 %v1313, %v1311
        %v1338 = vpack.c.b16 %v1314, %v1312
        %v1339 = vpack.c.b16 %v1317, %v1315
        %v1340 = vpack.c.b16 %v1318, %v1316
        %v1341 = vpack.c.b16 %v1321, %v1319
        %v1342 = vpack.c.b16 %v1322, %v1320
        %v1343 = vpack.c.b16 %v1325, %v1323
        %v1344 = vpack.c.b16 %v1326, %v1324
        %v1345 = vpack.c.b16 %v1329, %v1327
        %v1346 = vpack.c.b16 %v1330, %v1328
        %1363 = vmatprep.subr.bf16.mxu0 %v1346
        %1364 = vmatpush1.bf16.msra.mxu0 %v1345
        %1365 = vmatprep.subr.bf16.mxu0 %v1344
        %1366 = vmatpush1.bf16.msra.mxu0 %v1343
        %1367 = vmatprep.subr.bf16.mxu0 %v1342
        %1368 = vmatpush1.bf16.msra.mxu0 %v1341
        %1369 = vmatprep.subr.bf16.mxu0 %v1340
        %1370 = vmatpush1.bf16.msra.mxu0 %v1339
        %1371 = vmatprep.subr.bf16.mxu0 %v1338
        %1372 = vmatpush1.bf16.msra.mxu0 %v1337
        %1373 = vmatprep.subr.bf16.mxu0 %v1336
        %1374 = vmatpush1.bf16.msra.mxu0 %v1335
        %1375 = vmatprep.subr.bf16.mxu0 %v1334
        %1376 = vmatpush1.bf16.msra.mxu0 %v1333
        %1377 = vmatprep.subr.bf16.mxu0 %v1332
        %1378 = vmatpush1.bf16.msra.mxu0 %v1331
        %1379 = vmatprep.subr.bf16.mxu0 0
        %1380 = vmatpush2.bf16.msra.mxu0 0
        %1381 = vmatprep.subr.bf16.mxu0 0
        %1382 = vmatpush2.bf16.msra.mxu0 0
        %1383 = vmatprep.subr.bf16.mxu0 0
        %1384 = vmatpush2.bf16.msra.mxu0 0
        %1385 = vmatprep.subr.bf16.mxu0 0
        %1386 = vmatpush2.bf16.msra.mxu0 0
        %1387 = vmatprep.subr.bf16.mxu0 0
        %1388 = vmatpush2.bf16.msra.mxu0 0
        %1389 = vmatprep.subr.bf16.mxu0 0
        %1390 = vmatpush2.bf16.msra.mxu0 0
        %1391 = vmatprep.subr.bf16.mxu0 0
        %1392 = vmatpush2.bf16.msra.mxu0 0
        %1393 = vmatprep.subr.bf16.mxu0 0
        %1394 = vmatpush2.bf16.msra.mxu0 0
        %1395 = vmatprep.mubr.bf16.mxu0 0
        %1396 = vmatmul.mubr.bf16.gmra.mxu0 %v1266
        %v1397 = vpop.f32.mrf.mxu0
        %v1398 = vadd.f32 0.0, %v1397
        %v1399 = vpop.f32.mrf.mxu0
        %v1400 = vadd.f32 0.0, %v1399
        %v1401 = vpop.f32.mrf.mxu0
        %v1402 = vadd.f32 0.0, %v1401
        %v1403 = vpop.f32.mrf.mxu0
        %v1404 = vadd.f32 0.0, %v1403
        %1405 = vdwg.mxu0
        %v1406 = vadd.f32 %v1262, %v1398
        %v1407 = vadd.f32 %v1263, %v1400
        %v1408 = vadd.f32 %v1264, %v1402
        %v1409 = vadd.f32 %v1265, %v1404
        %1410 = vst [vmem:[#allocation2] sm:$0xff] %v1406
        %1411 = vst [vmem:[#allocation2 + $0x8] sm:$0xff] %v1407
        %1412 = vst [vmem:[#allocation2 + $0x10] sm:$0xff] %v1408
        %1413 = vst [vmem:[#allocation2 + $0x18] sm:$0xff] %v1409
        %p1414 = scmp.eq.s32.totalorder %s41, 1
        // Predicated region
        $region89: #{tpu_custom_call.1} parent=59 // pred_check
          %p1415 = pneg %p1414
        $region90: #{tpu_custom_call.1} parent=59 // pred_check_branch
          %1417 = sbr.rel (%p1415) target = $region92
        $region91: #{tpu_custom_call.1} parent=59 // pred_region
          %v1418 = vld [vmem:[#allocation2] sm:$0xff]
          %v1419 = vld [vmem:[#allocation2 + $0x8] sm:$0xff]
          %v1420 = vld [vmem:[#allocation2 + $0x10] sm:$0xff]
          %v1421 = vld [vmem:[#allocation2 + $0x18] sm:$0xff]
          %1422 = vst [vmem:[%s583] sm:$0xff] %v1418
          %1423 = vst [vmem:[%s583 + $0x8] sm:$0xff] %v1419
          %1424 = vst [vmem:[%s583 + $0x10] sm:$0xff] %v1420
          %1425 = vst [vmem:[%s583 + $0x18] sm:$0xff] %v1421
        $region92: #{tpu_custom_call.1} parent=59 // pred_fallthru
          _
        %s1426 = sand.u32 %s301, 1
        %s1427 = scalar_lea.sflag [#allocation7], %s1426
        %s1428 = sand.u32 %s301, 1
        %s1429 = smul.addr %s1428, 32
        %s1430 = scalar_lea.vmem [#allocation16], %s1429
        // Predicated region
        $region93: #{tpu_custom_call.1} parent=59 // pred_check
          %p1431 = pneg %p311
        $region94: #{tpu_custom_call.1} parent=59 // pred_check_branch
          %1433 = sbr.rel (%p1431) target = $region96
        $region95: #{tpu_custom_call.1} parent=59 // pred_region
          %s1435 = ssub.s32 512, 512
          %1436 = vsyncadd %s1427, %s1435
          %s1437 = smul.addr %s40, 4
          %s1438 = smul.addr %s1437, 128
          %s1439 = scalar_lea.hbm %s10, %s1438
          %s1440 = sshll.u32 %s1430, 4
          %s1441 = int_to_ptr.vmem [resolvable:$true] %s1440
          %1446 = dma.vmem_to_hbm [thread:$0]  %s1441, 512, %s1439, %s1427, 256, 256, 16
        $region96: #{tpu_custom_call.1} parent=59 // pred_fallthru
          _
      $region60: #{tpu_custom_call.1} parent=5 // pred_fallthru
        _
      %p1447 = scmp.le.s32.totalorder 2, %s31
      // Predicated region
      $region97: #{tpu_custom_call.1} parent=5 // pred_check
        %p1448 = pneg %p1447
      $region98: #{tpu_custom_call.1} parent=5 // pred_check_branch
        %1450 = sbr.rel (%p1448) target = $region100
      $region99: #{tpu_custom_call.1} parent=5 // pred_region
        %s1451 = ssub.s32 %s31, 2
        // Predicated region
        $region101: #{tpu_custom_call.1} parent=99 // pred_check
          %p1452 = pneg %p317
        $region102: #{tpu_custom_call.1} parent=99 // pred_check_branch
          %1454 = sbr.rel (%p1452) target = $region104
        $region103: #{tpu_custom_call.1} parent=99 // pred_region
          %s1455 = sand.u32 %s302, 1
          %s1456 = scalar_lea.sflag [#allocation7], %s1455
          %s1457 = sand.u32 %s302, 1
          %s1458 = smul.addr %s1457, 32
          %s1459 = scalar_lea.vmem [#allocation16], %s1458
          %1460 = dma.done %s1456, 512
        $region104: #{tpu_custom_call.1} parent=99 // pred_fallthru
          _
      $region100: #{tpu_custom_call.1} parent=5 // pred_fallthru
        _
    $region6: #{tpu_custom_call.1} parent=1 // loop_footer
      %s35 = sadd.s32 1, %s31
    $region7: #{tpu_custom_call.1} parent=1 // loop_footer_branch
      %30 = sbr.rel target = $region3
    $region8: #{tpu_custom_call.1} parent=1 // loop_exit
      _
    %1461 = vsyncpa [#allocation6], 1
    %s1462 = scalar_lea.sflag [#allocation6], 1
    %1463 = vsyncpa %s1462, 1
    %1464 = vsyncpa [#allocation9], 1
    %s1465 = scalar_lea.sflag [#allocation9], 1
    %1466 = vsyncpa %s1465, 1
    %1467 = vsyncpa [#allocation12], 1
    %s1468 = scalar_lea.sflag [#allocation12], 1
    %1469 = vsyncpa %s1468, 1
    %1470 = vsyncpa [#allocation15], 1
    %s1471 = scalar_lea.sflag [#allocation15], 1
    %1472 = vsyncpa %s1471, 1
    %1473 = vsyncpa [#allocation7], 1
    %s1474 = scalar_lea.sflag [#allocation7], 1
    %1475 = vsyncpa %s1474, 1

</llo_original>
